<compile_context>
chip_gen: v7x
topology: tpu7x:2x2x1
jax: 0.10.0
libtpu: 0.0.40
codegen_flags: <defaults>
</compile_context>

<pallas_src>
import functools

import jax
import jax.numpy as jnp
from jax.experimental import pallas as pl
from jax.experimental.pallas import tpu as pltpu

# ----- hyper-parameters (small, consistent with the module's __init__) -----
BATCH = 2
SEQ_LEN = 4          # seq_len
INPUT_SIZE = 16      # input_size (embedding dim D)
HIDDEN = 32          # hidden_size
PAD_SIZE = 8         # pad_size
N_FILTERS = 3        # n_filters (attention hops)
OUTPUT_SIZE = 4      # output_size
N_LAYERS = 1         # n_layers (GRU)
BI = False           # unidirectional -> b = 1
INITRANGE = 0.1

LANES = 128          # one f32 vreg lane width; output slab is 3 column blocks


def _p2v_kernel(x_ref, wfold_ref, emat_ref, rmat_ref, wih_ref, whh_ref,
                w2_ref, xfh_ref, bsum_ref, wl_ref, bias_ref, out_ref,
                *, S, B, H, F, P, O):
    """Fused Patient2Vec forward.

    x_ref     : (S*B, D)     time-major inputs, row index = s*B + b
    wfold_ref : (D, P)       repeat+Conv1d(k=D) folded weight
    emat_ref  : (P, D)       static 0/1 matrix: alpha -> alpha expanded over D
    rmat_ref  : (D, D)       static 0/1 matrix: gathers the repeat pattern back
    wih_ref   : (D, 3H)      GRU input weights (transposed), gate order r,z,n
    whh_ref   : (H, 3H)      GRU hidden weights (transposed)
    w2_ref    : (H, F)       conv2 (kernel_size = H) weights (transposed)
    xfh_ref   : (F, F*H)     static 0/1 expand matrix (beta -> beta per (f,h) lane)
    bsum_ref  : (B, S*B)     static 0/1 matrix summing over time per batch row
    wl_ref    : (F*H, O)     final linear weight (transposed)
    bias_ref  : (8, 3H)      packed biases, each row starts at lane 0:
                             row0=gbias(3H)  row1=b_hh_n(H)  row2=b2(F)
                             row3=bl(O)      row4=conv bias(1)
    out_ref   : (S*B, 3*128) packed output slab:
                             cols [0,P)        alpha (Hardtanh(0,1) weights)
                             cols [128,128+F)  beta  (softmax over time)
                             rows [0,B) cols [256,256+O)  softmax(linear(ctx))
    """
    x = x_ref[...]                                                   # (S*B, D)

    biases = bias_ref[...]                                           # (8, 3H)
    gbias = biases[0:1, :]                                           # (1, 3H)
    bhh_n = biases[1:2, 0:H]                                         # (1, H)
    b2 = biases[2:3, 0:F]                                            # (1, F)
    bl = biases[3:4, 0:O]                                            # (1, O)
    cb = biases[4:5, 0:1]                                            # (1, 1)

    # ---- alpha attention: repeat + Conv1d(k=D) folded into one matmul
    scores = jnp.dot(x, wfold_ref[...],
                     preferred_element_type=jnp.float32) + cb
    alpha = jnp.clip(scores, 0.0, 1.0)                               # Hardtanh(0,1)

    # ---- visit embedding: emb[n,d] = sum_j alpha[n,j] * x[n, (j*D+d)//P]
    # (factors through two static 0/1 matrices because pad_size | input_size)
    alpha_exp = jnp.dot(alpha, emat_ref[...],
                        preferred_element_type=jnp.float32)          # (S*B, D)
    emb = jnp.dot(alpha_exp * x, rmat_ref[...],
                  preferred_element_type=jnp.float32)                # (S*B, D)

    # ---- GRU encoder (n_layers=1, unidirectional, zero init state)
    # Input projection hoisted out of the time loop; biases pre-folded.
    # TODO(synk): nn.Dropout on the embedding is treated as inference-mode identity.
    gx_all = jnp.dot(emb, wih_ref[...],
                     preferred_element_type=jnp.float32) + gbias     # (S*B, 3H)
    whh = whh_ref[...]

    h = jnp.zeros((B, H), jnp.float32)
    states = []
    for t in range(S):                                               # static unroll (S small)
        gx = gx_all[t * B:(t + 1) * B, :]                            # (B, 3H)
        gh = jnp.dot(h, whh, preferred_element_type=jnp.float32)     # (B, 3H)
        r = jax.nn.sigmoid(gx[:, 0:H] + gh[:, 0:H])
        z = jax.nn.sigmoid(gx[:, H:2 * H] + gh[:, H:2 * H])
        n = jnp.tanh(gx[:, 2 * H:3 * H] + r * (gh[:, 2 * H:3 * H] + bhh_n))
        h = (1.0 - z) * n + z * h
        states.append(h)                                             # (B, H) each
    states_slab = jnp.concatenate(states, axis=0)                    # (S*B, H)

    # ---- beta attention: ONE matmul for all (s, b), softmax over time
    att = jnp.dot(states_slab, w2_ref[...],
                  preferred_element_type=jnp.float32) + b2           # (S*B, F)
    m = att[0:B, :]
    for t in range(1, S):
        m = jnp.maximum(m, att[t * B:(t + 1) * B, :])
    e = jnp.exp(att - jnp.concatenate([m] * S, axis=0))              # one exp on full slab
    den = e[0:B, :]
    for t in range(1, S):
        den = den + e[t * B:(t + 1) * B, :]
    beta = e / jnp.concatenate([den] * S, axis=0)                    # (S*B, F)

    # ---- context[b, f*H + h] = sum_s beta[s*B+b, f] * states[s*B+b, h]
    states_exp = jnp.concatenate([states_slab] * F, axis=1)          # (S*B, F*H)
    beta_exp = jnp.dot(beta, xfh_ref[...],
                       preferred_element_type=jnp.float32)           # (S*B, F*H)
    context = jnp.dot(bsum_ref[...], beta_exp * states_exp,
                      preferred_element_type=jnp.float32)            # (B, F*H)

    # ---- final linear + softmax
    y = jnp.dot(context, wl_ref[...],
                preferred_element_type=jnp.float32) + bl
    y = y - jnp.max(y, axis=-1, keepdims=True)
    ey = jnp.exp(y)
    y_soft = ey / jnp.sum(ey, axis=-1, keepdims=True)                # (B, O)

    # ---- single packed output slab; each piece at a 128-lane-aligned column block
    SB = S * B
    out_ref[...] = jnp.zeros((SB, 3 * LANES), jnp.float32)
    out_ref[:, 0:P] = alpha
    out_ref[:, LANES:LANES + F] = beta
    out_ref[0:B, 2 * LANES:2 * LANES + O] = y_soft


@jax.jit
def patient2vec_forward(inputs, inputs_other, params):
    """inputs: (B, S, D) float32.  inputs_other is unused by the torch forward."""
    del inputs_other
    B, S, D = inputs.shape
    P, H, F, O = PAD_SIZE, HIDDEN, N_FILTERS, OUTPUT_SIZE
    # TODO(synk): for D % P != 0 the emb factorization below does not apply; fall
    # back to shipping the replicated (S*B, P, D) input in that configuration.
    assert D % P == 0, "pad_size must divide input_size for the folded-repeat path"
    c = D // P

    # time-major rows: row index = s*B + b
    x_tm = jnp.transpose(inputs, (1, 0, 2)).reshape(S * B, D)

    cw = params["conv_w"].reshape(D)

    # static index map of np.repeat(..., P, axis=2).reshape(B, S, P, D):
    #   x_rep[n, j, d] = x[n, g(j, d)],   g(j, d) = (j*D + d) // P
    j_idx = jnp.arange(P)
    d_idx = jnp.arange(D)
    k_idx = jnp.arange(D)
    g = (j_idx[:, None] * D + d_idx[None, :]) // P                          # (P, D)
    onehot = (g[:, :, None] == k_idx[None, None, :]).astype(jnp.float32)    # (P, D, D)
    w_fold = jnp.einsum('d,jdk->kj', cw, onehot)                            # (D, P)
    emat = (k_idx[None, :] // c == j_idx[:, None]).astype(jnp.float32)      # (P, D)
    rmat = (k_idx[:, None] % c == d_idx[None, :] // P).astype(jnp.float32)  # (D, D)

    wih_t = params["gru_w_ih"].T                                            # (D, 3H)
    whh_t = params["gru_w_hh"].T                                            # (H, 3H)
    bih = params["gru_b_ih"]
    bhh = params["gru_b_hh"]
    gbias = bih + jnp.concatenate([bhh[:2 * H], jnp.zeros((H,), jnp.float32)])  # (3H,)
    bhh_n = bhh[2 * H:]                                                     # (H,)

    w2_t = params["conv2_w"][:, 0, :].T                                     # (H, F)
    expand_fh = (jnp.arange(F * H)[None, :] // H
                 == jnp.arange(F)[:, None]).astype(jnp.float32)             # (F, F*H)
    bsum = (jnp.arange(S * B)[None, :] % B
            == jnp.arange(B)[:, None]).astype(jnp.float32)                  # (B, S*B)
    wl_t = params["lin_w"].T                                                # (F*H, O)

    # pack every bias row-vector (lane-0-aligned) into one (8, 3H) slab
    def _row(vec, width=3 * H):
        v = vec.reshape(1, -1).astype(jnp.float32)
        return jnp.pad(v, ((0, 0), (0, width - v.shape[1])))

    bias_pack = jnp.concatenate(
        [_row(gbias), _row(bhh_n), _row(params["conv2_b"]),
         _row(params["lin_b"]), _row(params["conv_b"]),
         jnp.zeros((3, 3 * H), jnp.float32)], axis=0)                       # (8, 3H)

    kernel = functools.partial(_p2v_kernel, S=S, B=B, H=H, F=F, P=P, O=O)
    vmem = pl.BlockSpec(memory_space=pltpu.MemorySpace.VMEM)

    slab = pl.pallas_call(
        kernel,
        out_shape=jax.ShapeDtypeStruct((S * B, 3 * LANES), jnp.float32),
        in_specs=[vmem] * 11,
        out_specs=vmem,
    )(x_tm, w_fold, emat, rmat, wih_t, whh_t, w2_t, expand_fh, bsum, wl_t,
      bias_pack)

    alpha = jnp.transpose(slab[:, 0:P].reshape(S, B, P), (1, 0, 2))          # (B, S, P)
    beta = jnp.transpose(slab[:, LANES:LANES + F].reshape(S, B, F), (1, 2, 0))  # (B, F, S)
    out = slab[0:B, 2 * LANES:2 * LANES + O]                                 # (B, O)
    return out, alpha, beta


def init_params(key):
    """All parameters ~ Uniform(-initrange, initrange), like init_weights()."""
    shapes = {
        "conv_w": (1, 1, INPUT_SIZE),                    # nn.Conv1d(1, 1, k=D, stride=2)
        "conv_b": (1,),
        "conv2_w": (N_FILTERS, 1, HIDDEN),               # nn.Conv1d(1, F, k=H, stride=2)
        "conv2_b": (N_FILTERS,),
        "gru_w_ih": (3 * HIDDEN, INPUT_SIZE),            # GRU gate order r, z, n
        "gru_w_hh": (3 * HIDDEN, HIDDEN),
        "gru_b_ih": (3 * HIDDEN,),
        "gru_b_hh": (3 * HIDDEN,),
        "att_w1": (1, HIDDEN),                           # declared but unused in forward
        "lin_w": (OUTPUT_SIZE, N_FILTERS * HIDDEN),
        "lin_b": (OUTPUT_SIZE,),
    }
    keys = jax.random.split(key, len(shapes))
    return {name: jax.random.uniform(k, shape, jnp.float32, -INITRANGE, INITRANGE)
            for (name, shape), k in zip(shapes.items(), keys)}


if __name__ == "__main__":
    key = jax.random.PRNGKey(0)
    kp, kx, ko = jax.random.split(key, 3)
    params = init_params(kp)
    inputs = jax.random.normal(kx, (BATCH, SEQ_LEN, INPUT_SIZE), jnp.float32)
    inputs_other = jax.random.normal(ko, (BATCH, 4), jnp.float32)  # unused by forward

    out, alpha, beta = patient2vec_forward(inputs, inputs_other, params)
    out, alpha, beta = jax.block_until_ready((out, alpha, beta))

    assert out.shape == (BATCH, OUTPUT_SIZE)
    assert alpha.shape == (BATCH, SEQ_LEN, PAD_SIZE)
    assert beta.shape == (BATCH, N_FILTERS, SEQ_LEN)
    # softmax outputs must sum to 1 along their softmax axes
    assert jnp.allclose(jnp.sum(out, axis=-1), 1.0, atol=1e-4)
    assert jnp.allclose(jnp.sum(beta, axis=-1), 1.0, atol=1e-4)
    assert bool(jnp.all(jnp.isfinite(out)))
    assert bool(jnp.all(jnp.isfinite(alpha)))
    assert bool(jnp.all(jnp.isfinite(beta)))
    print("KERNEL_OK")
</pallas_src>

<mosaic_0001>
module attributes {stable_mosaic.version = 11 : i64} {
  func.func @_p2v_kernel(%arg0: memref<8x16xf32, #tpu.memory_space<vmem>>, %arg1: memref<16x8xf32, #tpu.memory_space<vmem>>, %arg2: memref<8x16xf32, #tpu.memory_space<vmem>>, %arg3: memref<16x16xf32, #tpu.memory_space<vmem>>, %arg4: memref<16x96xf32, #tpu.memory_space<vmem>>, %arg5: memref<32x96xf32, #tpu.memory_space<vmem>>, %arg6: memref<32x3xf32, #tpu.memory_space<vmem>>, %arg7: memref<3x96xf32, #tpu.memory_space<vmem>>, %arg8: memref<2x8xf32, #tpu.memory_space<vmem>>, %arg9: memref<96x4xf32, #tpu.memory_space<vmem>>, %arg10: memref<8x96xf32, #tpu.memory_space<vmem>>, %arg11: memref<8x384xf32, #tpu.memory_space<vmem>>) attributes {dimension_semantics = [], scalar_prefetch = 0 : i64, scratch_operands = 0 : i64, tpu.core_type = #tpu.core_type<tc>} {
    %c0 = arith.constant 0 : index
    %c0_0 = arith.constant 0 : index
    %0 = vector.load %arg0[%c0, %c0_0] : memref<8x16xf32, #tpu.memory_space<vmem>>, vector<8x16xf32>
    %c0_1 = arith.constant 0 : index
    %c0_2 = arith.constant 0 : index
    %1 = vector.load %arg10[%c0_1, %c0_2] : memref<8x96xf32, #tpu.memory_space<vmem>>, vector<8x96xf32>
    %2 = vector.extract_strided_slice %1 {offsets = [0, 0], sizes = [1, 96], strides = [1, 1]} : vector<8x96xf32> to vector<1x96xf32>
    %3 = vector.extract_strided_slice %1 {offsets = [1, 0], sizes = [1, 32], strides = [1, 1]} : vector<8x96xf32> to vector<1x32xf32>
    %4 = vector.extract_strided_slice %1 {offsets = [2, 0], sizes = [1, 3], strides = [1, 1]} : vector<8x96xf32> to vector<1x3xf32>
    %5 = vector.extract_strided_slice %1 {offsets = [3, 0], sizes = [1, 4], strides = [1, 1]} : vector<8x96xf32> to vector<1x4xf32>
    %6 = vector.extract_strided_slice %1 {offsets = [4, 0], sizes = [1, 1], strides = [1, 1]} : vector<8x96xf32> to vector<1x1xf32>
    %c0_3 = arith.constant 0 : index
    %c0_4 = arith.constant 0 : index
    %7 = vector.load %arg1[%c0_3, %c0_4] : memref<16x8xf32, #tpu.memory_space<vmem>>, vector<16x8xf32>
    %cst = arith.constant dense<0.000000e+00> : vector<8x8xf32>
    %8 = tpu.matmul %0, %7, %cst {dimension_numbers = #tpu.dot_dimension_numbers<[1], [0], [0], [1], [0, 0, 1, 1], [], []>} : vector<8x16xf32>, vector<16x8xf32>, vector<8x8xf32> -> vector<8x8xf32>
    %9 = vector.broadcast %6 : vector<1x1xf32> to vector<8x8xf32>
    %10 = arith.addf %8, %9 : vector<8x8xf32>
    %cst_5 = arith.constant 0.000000e+00 : f32
    %cst_6 = arith.constant 1.000000e+00 : f32
    %11 = vector.broadcast %cst_5 : f32 to vector<8x8xf32>
    %12 = arith.maximumf %11, %10 : vector<8x8xf32>
    %13 = vector.broadcast %cst_6 : f32 to vector<8x8xf32>
    %14 = arith.minimumf %13, %12 : vector<8x8xf32>
    %c0_7 = arith.constant 0 : index
    %c0_8 = arith.constant 0 : index
    %15 = vector.load %arg2[%c0_7, %c0_8] : memref<8x16xf32, #tpu.memory_space<vmem>>, vector<8x16xf32>
    %cst_9 = arith.constant dense<0.000000e+00> : vector<8x16xf32>
    %16 = tpu.matmul %14, %15, %cst_9 {dimension_numbers = #tpu.dot_dimension_numbers<[1], [0], [0], [1], [0, 0, 1, 1], [], []>} : vector<8x8xf32>, vector<8x16xf32>, vector<8x16xf32> -> vector<8x16xf32>
    %17 = arith.mulf %16, %0 : vector<8x16xf32>
    %c0_10 = arith.constant 0 : index
    %c0_11 = arith.constant 0 : index
    %18 = vector.load %arg3[%c0_10, %c0_11] : memref<16x16xf32, #tpu.memory_space<vmem>>, vector<16x16xf32>
    %cst_12 = arith.constant dense<0.000000e+00> : vector<8x16xf32>
    %19 = tpu.matmul %17, %18, %cst_12 {dimension_numbers = #tpu.dot_dimension_numbers<[1], [0], [0], [1], [0, 0, 1, 1], [], []>} : vector<8x16xf32>, vector<16x16xf32>, vector<8x16xf32> -> vector<8x16xf32>
    %c0_13 = arith.constant 0 : index
    %c0_14 = arith.constant 0 : index
    %20 = vector.load %arg4[%c0_13, %c0_14] : memref<16x96xf32, #tpu.memory_space<vmem>>, vector<16x96xf32>
    %cst_15 = arith.constant dense<0.000000e+00> : vector<8x96xf32>
    %21 = tpu.matmul %19, %20, %cst_15 {dimension_numbers = #tpu.dot_dimension_numbers<[1], [0], [0], [1], [0, 0, 1, 1], [], []>} : vector<8x16xf32>, vector<16x96xf32>, vector<8x96xf32> -> vector<8x96xf32>
    %22 = vector.broadcast %2 : vector<1x96xf32> to vector<8x96xf32>
    %23 = arith.addf %21, %22 : vector<8x96xf32>
    %c0_16 = arith.constant 0 : index
    %c0_17 = arith.constant 0 : index
    %24 = vector.load %arg5[%c0_16, %c0_17] : memref<32x96xf32, #tpu.memory_space<vmem>>, vector<32x96xf32>
    %cst_18 = arith.constant 0.000000e+00 : f32
    %25 = vector.broadcast %cst_18 : f32 to vector<2x32xf32>
    %26 = vector.extract_strided_slice %23 {offsets = [0, 0], sizes = [2, 96], strides = [1, 1]} : vector<8x96xf32> to vector<2x96xf32>
    %cst_19 = arith.constant dense<0.000000e+00> : vector<2x96xf32>
    %27 = tpu.matmul %25, %24, %cst_19 {dimension_numbers = #tpu.dot_dimension_numbers<[1], [0], [0], [1], [0, 0, 1, 1], [], []>} : vector<2x32xf32>, vector<32x96xf32>, vector<2x96xf32> -> vector<2x96xf32>
    %28 = vector.extract_strided_slice %26 {offsets = [0, 0], sizes = [2, 32], strides = [1, 1]} : vector<2x96xf32> to vector<2x32xf32>
    %29 = vector.extract_strided_slice %27 {offsets = [0, 0], sizes = [2, 32], strides = [1, 1]} : vector<2x96xf32> to vector<2x32xf32>
    %30 = arith.addf %28, %29 : vector<2x32xf32>
    %31 = arith.negf %30 : vector<2x32xf32>
    %32 = math.exp %31 : vector<2x32xf32>
    %cst_20 = arith.constant 1.000000e+00 : f32
    %33 = vector.broadcast %cst_20 : f32 to vector<2x32xf32>
    %34 = arith.addf %33, %32 : vector<2x32xf32>
    %35 = arith.divf %33, %34 : vector<2x32xf32>
    %36 = vector.extract_strided_slice %26 {offsets = [0, 32], sizes = [2, 32], strides = [1, 1]} : vector<2x96xf32> to vector<2x32xf32>
    %37 = vector.extract_strided_slice %27 {offsets = [0, 32], sizes = [2, 32], strides = [1, 1]} : vector<2x96xf32> to vector<2x32xf32>
    %38 = arith.addf %36, %37 : vector<2x32xf32>
    %39 = arith.negf %38 : vector<2x32xf32>
    %40 = math.exp %39 : vector<2x32xf32>
    %cst_21 = arith.constant 1.000000e+00 : f32
    %41 = vector.broadcast %cst_21 : f32 to vector<2x32xf32>
    %42 = arith.addf %41, %40 : vector<2x32xf32>
    %43 = arith.divf %41, %42 : vector<2x32xf32>
    %44 = vector.extract_strided_slice %26 {offsets = [0, 64], sizes = [2, 32], strides = [1, 1]} : vector<2x96xf32> to vector<2x32xf32>
    %45 = vector.extract_strided_slice %27 {offsets = [0, 64], sizes = [2, 32], strides = [1, 1]} : vector<2x96xf32> to vector<2x32xf32>
    %46 = vector.broadcast %3 : vector<1x32xf32> to vector<2x32xf32>
    %47 = arith.addf %45, %46 : vector<2x32xf32>
    %48 = arith.mulf %35, %47 : vector<2x32xf32>
    %49 = arith.addf %44, %48 : vector<2x32xf32>
    %50 = math.tanh %49 : vector<2x32xf32>
    %cst_22 = arith.constant 1.000000e+00 : f32
    %51 = vector.broadcast %cst_22 : f32 to vector<2x32xf32>
    %52 = arith.subf %51, %43 : vector<2x32xf32>
    %53 = arith.mulf %52, %50 : vector<2x32xf32>
    %54 = arith.mulf %43, %25 : vector<2x32xf32>
    %55 = arith.addf %53, %54 : vector<2x32xf32>
    %56 = vector.extract_strided_slice %23 {offsets = [2, 0], sizes = [2, 96], strides = [1, 1]} : vector<8x96xf32> to vector<2x96xf32>
    %cst_23 = arith.constant dense<0.000000e+00> : vector<2x96xf32>
    %57 = tpu.matmul %55, %24, %cst_23 {dimension_numbers = #tpu.dot_dimension_numbers<[1], [0], [0], [1], [0, 0, 1, 1], [], []>} : vector<2x32xf32>, vector<32x96xf32>, vector<2x96xf32> -> vector<2x96xf32>
    %58 = vector.extract_strided_slice %56 {offsets = [0, 0], sizes = [2, 32], strides = [1, 1]} : vector<2x96xf32> to vector<2x32xf32>
    %59 = vector.extract_strided_slice %57 {offsets = [0, 0], sizes = [2, 32], strides = [1, 1]} : vector<2x96xf32> to vector<2x32xf32>
    %60 = arith.addf %58, %59 : vector<2x32xf32>
    %61 = arith.negf %60 : vector<2x32xf32>
    %62 = math.exp %61 : vector<2x32xf32>
    %cst_24 = arith.constant 1.000000e+00 : f32
    %63 = vector.broadcast %cst_24 : f32 to vector<2x32xf32>
    %64 = arith.addf %63, %62 : vector<2x32xf32>
    %65 = arith.divf %63, %64 : vector<2x32xf32>
    %66 = vector.extract_strided_slice %56 {offsets = [0, 32], sizes = [2, 32], strides = [1, 1]} : vector<2x96xf32> to vector<2x32xf32>
    %67 = vector.extract_strided_slice %57 {offsets = [0, 32], sizes = [2, 32], strides = [1, 1]} : vector<2x96xf32> to vector<2x32xf32>
    %68 = arith.addf %66, %67 : vector<2x32xf32>
    %69 = arith.negf %68 : vector<2x32xf32>
    %70 = math.exp %69 : vector<2x32xf32>
    %cst_25 = arith.constant 1.000000e+00 : f32
    %71 = vector.broadcast %cst_25 : f32 to vector<2x32xf32>
    %72 = arith.addf %71, %70 : vector<2x32xf32>
    %73 = arith.divf %71, %72 : vector<2x32xf32>
    %74 = vector.extract_strided_slice %56 {offsets = [0, 64], sizes = [2, 32], strides = [1, 1]} : vector<2x96xf32> to vector<2x32xf32>
    %75 = vector.extract_strided_slice %57 {offsets = [0, 64], sizes = [2, 32], strides = [1, 1]} : vector<2x96xf32> to vector<2x32xf32>
    %76 = vector.broadcast %3 : vector<1x32xf32> to vector<2x32xf32>
    %77 = arith.addf %75, %76 : vector<2x32xf32>
    %78 = arith.mulf %65, %77 : vector<2x32xf32>
    %79 = arith.addf %74, %78 : vector<2x32xf32>
    %80 = math.tanh %79 : vector<2x32xf32>
    %cst_26 = arith.constant 1.000000e+00 : f32
    %81 = vector.broadcast %cst_26 : f32 to vector<2x32xf32>
    %82 = arith.subf %81, %73 : vector<2x32xf32>
    %83 = arith.mulf %82, %80 : vector<2x32xf32>
    %84 = arith.mulf %73, %55 : vector<2x32xf32>
    %85 = arith.addf %83, %84 : vector<2x32xf32>
    %86 = vector.extract_strided_slice %23 {offsets = [4, 0], sizes = [2, 96], strides = [1, 1]} : vector<8x96xf32> to vector<2x96xf32>
    %cst_27 = arith.constant dense<0.000000e+00> : vector<2x96xf32>
    %87 = tpu.matmul %85, %24, %cst_27 {dimension_numbers = #tpu.dot_dimension_numbers<[1], [0], [0], [1], [0, 0, 1, 1], [], []>} : vector<2x32xf32>, vector<32x96xf32>, vector<2x96xf32> -> vector<2x96xf32>
    %88 = vector.extract_strided_slice %86 {offsets = [0, 0], sizes = [2, 32], strides = [1, 1]} : vector<2x96xf32> to vector<2x32xf32>
    %89 = vector.extract_strided_slice %87 {offsets = [0, 0], sizes = [2, 32], strides = [1, 1]} : vector<2x96xf32> to vector<2x32xf32>
    %90 = arith.addf %88, %89 : vector<2x32xf32>
    %91 = arith.negf %90 : vector<2x32xf32>
    %92 = math.exp %91 : vector<2x32xf32>
    %cst_28 = arith.constant 1.000000e+00 : f32
    %93 = vector.broadcast %cst_28 : f32 to vector<2x32xf32>
    %94 = arith.addf %93, %92 : vector<2x32xf32>
    %95 = arith.divf %93, %94 : vector<2x32xf32>
    %96 = vector.extract_strided_slice %86 {offsets = [0, 32], sizes = [2, 32], strides = [1, 1]} : vector<2x96xf32> to vector<2x32xf32>
    %97 = vector.extract_strided_slice %87 {offsets = [0, 32], sizes = [2, 32], strides = [1, 1]} : vector<2x96xf32> to vector<2x32xf32>
    %98 = arith.addf %96, %97 : vector<2x32xf32>
    %99 = arith.negf %98 : vector<2x32xf32>
    %100 = math.exp %99 : vector<2x32xf32>
    %cst_29 = arith.constant 1.000000e+00 : f32
    %101 = vector.broadcast %cst_29 : f32 to vector<2x32xf32>
    %102 = arith.addf %101, %100 : vector<2x32xf32>
    %103 = arith.divf %101, %102 : vector<2x32xf32>
    %104 = vector.extract_strided_slice %86 {offsets = [0, 64], sizes = [2, 32], strides = [1, 1]} : vector<2x96xf32> to vector<2x32xf32>
    %105 = vector.extract_strided_slice %87 {offsets = [0, 64], sizes = [2, 32], strides = [1, 1]} : vector<2x96xf32> to vector<2x32xf32>
    %106 = vector.broadcast %3 : vector<1x32xf32> to vector<2x32xf32>
    %107 = arith.addf %105, %106 : vector<2x32xf32>
    %108 = arith.mulf %95, %107 : vector<2x32xf32>
    %109 = arith.addf %104, %108 : vector<2x32xf32>
    %110 = math.tanh %109 : vector<2x32xf32>
    %cst_30 = arith.constant 1.000000e+00 : f32
    %111 = vector.broadcast %cst_30 : f32 to vector<2x32xf32>
    %112 = arith.subf %111, %103 : vector<2x32xf32>
    %113 = arith.mulf %112, %110 : vector<2x32xf32>
    %114 = arith.mulf %103, %85 : vector<2x32xf32>
    %115 = arith.addf %113, %114 : vector<2x32xf32>
    %116 = vector.extract_strided_slice %23 {offsets = [6, 0], sizes = [2, 96], strides = [1, 1]} : vector<8x96xf32> to vector<2x96xf32>
    %cst_31 = arith.constant dense<0.000000e+00> : vector<2x96xf32>
    %117 = tpu.matmul %115, %24, %cst_31 {dimension_numbers = #tpu.dot_dimension_numbers<[1], [0], [0], [1], [0, 0, 1, 1], [], []>} : vector<2x32xf32>, vector<32x96xf32>, vector<2x96xf32> -> vector<2x96xf32>
    %118 = vector.extract_strided_slice %116 {offsets = [0, 0], sizes = [2, 32], strides = [1, 1]} : vector<2x96xf32> to vector<2x32xf32>
    %119 = vector.extract_strided_slice %117 {offsets = [0, 0], sizes = [2, 32], strides = [1, 1]} : vector<2x96xf32> to vector<2x32xf32>
    %120 = arith.addf %118, %119 : vector<2x32xf32>
    %121 = arith.negf %120 : vector<2x32xf32>
    %122 = math.exp %121 : vector<2x32xf32>
    %cst_32 = arith.constant 1.000000e+00 : f32
    %123 = vector.broadcast %cst_32 : f32 to vector<2x32xf32>
    %124 = arith.addf %123, %122 : vector<2x32xf32>
    %125 = arith.divf %123, %124 : vector<2x32xf32>
    %126 = vector.extract_strided_slice %116 {offsets = [0, 32], sizes = [2, 32], strides = [1, 1]} : vector<2x96xf32> to vector<2x32xf32>
    %127 = vector.extract_strided_slice %117 {offsets = [0, 32], sizes = [2, 32], strides = [1, 1]} : vector<2x96xf32> to vector<2x32xf32>
    %128 = arith.addf %126, %127 : vector<2x32xf32>
    %129 = arith.negf %128 : vector<2x32xf32>
    %130 = math.exp %129 : vector<2x32xf32>
    %cst_33 = arith.constant 1.000000e+00 : f32
    %131 = vector.broadcast %cst_33 : f32 to vector<2x32xf32>
    %132 = arith.addf %131, %130 : vector<2x32xf32>
    %133 = arith.divf %131, %132 : vector<2x32xf32>
    %134 = vector.extract_strided_slice %116 {offsets = [0, 64], sizes = [2, 32], strides = [1, 1]} : vector<2x96xf32> to vector<2x32xf32>
    %135 = vector.extract_strided_slice %117 {offsets = [0, 64], sizes = [2, 32], strides = [1, 1]} : vector<2x96xf32> to vector<2x32xf32>
    %136 = vector.broadcast %3 : vector<1x32xf32> to vector<2x32xf32>
    %137 = arith.addf %135, %136 : vector<2x32xf32>
    %138 = arith.mulf %125, %137 : vector<2x32xf32>
    %139 = arith.addf %134, %138 : vector<2x32xf32>
    %140 = math.tanh %139 : vector<2x32xf32>
    %cst_34 = arith.constant 1.000000e+00 : f32
    %141 = vector.broadcast %cst_34 : f32 to vector<2x32xf32>
    %142 = arith.subf %141, %133 : vector<2x32xf32>
    %143 = arith.mulf %142, %140 : vector<2x32xf32>
    %144 = arith.mulf %133, %115 : vector<2x32xf32>
    %145 = arith.addf %143, %144 : vector<2x32xf32>
    %146 = tpu.concatenate %55, %85, %115, %145 in 0 : vector<2x32xf32>, vector<2x32xf32>, vector<2x32xf32>, vector<2x32xf32> -> vector<8x32xf32>
    %c0_35 = arith.constant 0 : index
    %c0_36 = arith.constant 0 : index
    %147 = vector.load %arg6[%c0_35, %c0_36] : memref<32x3xf32, #tpu.memory_space<vmem>>, vector<32x3xf32>
    %cst_37 = arith.constant dense<0.000000e+00> : vector<8x3xf32>
    %148 = tpu.matmul %146, %147, %cst_37 {dimension_numbers = #tpu.dot_dimension_numbers<[1], [0], [0], [1], [0, 0, 1, 1], [], []>} : vector<8x32xf32>, vector<32x3xf32>, vector<8x3xf32> -> vector<8x3xf32>
    %149 = vector.broadcast %4 : vector<1x3xf32> to vector<8x3xf32>
    %150 = arith.addf %148, %149 : vector<8x3xf32>
    %151 = vector.extract_strided_slice %150 {offsets = [0, 0], sizes = [2, 3], strides = [1, 1]} : vector<8x3xf32> to vector<2x3xf32>
    %152 = vector.extract_strided_slice %150 {offsets = [2, 0], sizes = [2, 3], strides = [1, 1]} : vector<8x3xf32> to vector<2x3xf32>
    %153 = arith.maximumf %151, %152 : vector<2x3xf32>
    %154 = vector.extract_strided_slice %150 {offsets = [4, 0], sizes = [2, 3], strides = [1, 1]} : vector<8x3xf32> to vector<2x3xf32>
    %155 = arith.maximumf %153, %154 : vector<2x3xf32>
    %156 = vector.extract_strided_slice %150 {offsets = [6, 0], sizes = [2, 3], strides = [1, 1]} : vector<8x3xf32> to vector<2x3xf32>
    %157 = arith.maximumf %155, %156 : vector<2x3xf32>
    %158 = tpu.concatenate %157, %157, %157, %157 in 0 : vector<2x3xf32>, vector<2x3xf32>, vector<2x3xf32>, vector<2x3xf32> -> vector<8x3xf32>
    %159 = arith.subf %150, %158 : vector<8x3xf32>
    %160 = math.exp %159 : vector<8x3xf32>
    %161 = vector.extract_strided_slice %160 {offsets = [0, 0], sizes = [2, 3], strides = [1, 1]} : vector<8x3xf32> to vector<2x3xf32>
    %162 = vector.extract_strided_slice %160 {offsets = [2, 0], sizes = [2, 3], strides = [1, 1]} : vector<8x3xf32> to vector<2x3xf32>
    %163 = arith.addf %161, %162 : vector<2x3xf32>
    %164 = vector.extract_strided_slice %160 {offsets = [4, 0], sizes = [2, 3], strides = [1, 1]} : vector<8x3xf32> to vector<2x3xf32>
    %165 = arith.addf %163, %164 : vector<2x3xf32>
    %166 = vector.extract_strided_slice %160 {offsets = [6, 0], sizes = [2, 3], strides = [1, 1]} : vector<8x3xf32> to vector<2x3xf32>
    %167 = arith.addf %165, %166 : vector<2x3xf32>
    %168 = tpu.concatenate %167, %167, %167, %167 in 0 : vector<2x3xf32>, vector<2x3xf32>, vector<2x3xf32>, vector<2x3xf32> -> vector<8x3xf32>
    %169 = arith.divf %160, %168 : vector<8x3xf32>
    %170 = tpu.concatenate %146, %146, %146 in 1 : vector<8x32xf32>, vector<8x32xf32>, vector<8x32xf32> -> vector<8x96xf32>
    %c0_38 = arith.constant 0 : index
    %c0_39 = arith.constant 0 : index
    %171 = vector.load %arg7[%c0_38, %c0_39] : memref<3x96xf32, #tpu.memory_space<vmem>>, vector<3x96xf32>
    %cst_40 = arith.constant dense<0.000000e+00> : vector<8x96xf32>
    %172 = tpu.matmul %169, %171, %cst_40 {dimension_numbers = #tpu.dot_dimension_numbers<[1], [0], [0], [1], [0, 0, 1, 1], [], []>} : vector<8x3xf32>, vector<3x96xf32>, vector<8x96xf32> -> vector<8x96xf32>
    %c0_41 = arith.constant 0 : index
    %c0_42 = arith.constant 0 : index
    %173 = vector.load %arg8[%c0_41, %c0_42] : memref<2x8xf32, #tpu.memory_space<vmem>>, vector<2x8xf32>
    %174 = arith.mulf %172, %170 : vector<8x96xf32>
    %cst_43 = arith.constant dense<0.000000e+00> : vector<2x96xf32>
    %175 = tpu.matmul %173, %174, %cst_43 {dimension_numbers = #tpu.dot_dimension_numbers<[1], [0], [0], [1], [0, 0, 1, 1], [], []>} : vector<2x8xf32>, vector<8x96xf32>, vector<2x96xf32> -> vector<2x96xf32>
    %c0_44 = arith.constant 0 : index
    %c0_45 = arith.constant 0 : index
    %176 = vector.load %arg9[%c0_44, %c0_45] : memref<96x4xf32, #tpu.memory_space<vmem>>, vector<96x4xf32>
    %cst_46 = arith.constant dense<0.000000e+00> : vector<2x4xf32>
    %177 = tpu.matmul %175, %176, %cst_46 {dimension_numbers = #tpu.dot_dimension_numbers<[1], [0], [0], [1], [0, 0, 1, 1], [], []>} : vector<2x96xf32>, vector<96x4xf32>, vector<2x4xf32> -> vector<2x4xf32>
    %178 = vector.broadcast %5 : vector<1x4xf32> to vector<2x4xf32>
    %179 = arith.addf %177, %178 : vector<2x4xf32>
    %cst_47 = arith.constant dense<0xFF800000> : vector<2xf32>
    %180 = vector.multi_reduction <maximumf>, %179, %cst_47 [1] : vector<2x4xf32> to vector<2xf32>
    %181 = vector.shape_cast %180 : vector<2xf32> to vector<2x1xf32>
    %182 = vector.broadcast %181 : vector<2x1xf32> to vector<2x4xf32>
    %183 = arith.subf %179, %182 : vector<2x4xf32>
    %184 = math.exp %183 : vector<2x4xf32>
    %cst_48 = arith.constant dense<0.000000e+00> : vector<2xf32>
    %185 = vector.multi_reduction <add>, %184, %cst_48 [1] : vector<2x4xf32> to vector<2xf32>
    %186 = vector.shape_cast %185 : vector<2xf32> to vector<2x1xf32>
    %187 = vector.broadcast %186 : vector<2x1xf32> to vector<2x4xf32>
    %188 = arith.divf %184, %187 : vector<2x4xf32>
    %cst_49 = arith.constant 0.000000e+00 : f32
    %189 = vector.broadcast %cst_49 : f32 to vector<8x384xf32>
    %c0_50 = arith.constant 0 : index
    %c0_51 = arith.constant 0 : index
    %190 = vector.load %arg11[%c0_50, %c0_51] : memref<8x384xf32, #tpu.memory_space<vmem>>, vector<8x384xf32>
    tpu.vector_store %arg11[%c0_50, %c0_51], %189 {strides = array<i32>} : memref<8x384xf32, #tpu.memory_space<vmem>>, vector<8x384xf32>,
    %c0_52 = arith.constant 0 : index
    %c0_53 = arith.constant 0 : index
    %191 = vector.load %arg11[%c0_52, %c0_53] : memref<8x384xf32, #tpu.memory_space<vmem>>, vector<8x8xf32>
    tpu.vector_store %arg11[%c0_52, %c0_53], %14 {strides = array<i32>} : memref<8x384xf32, #tpu.memory_space<vmem>>, vector<8x8xf32>,
    %c0_54 = arith.constant 0 : index
    %c128 = arith.constant 128 : index
    %192 = vector.load %arg11[%c0_54, %c128] : memref<8x384xf32, #tpu.memory_space<vmem>>, vector<8x3xf32>
    tpu.vector_store %arg11[%c0_54, %c128], %169 {strides = array<i32>} : memref<8x384xf32, #tpu.memory_space<vmem>>, vector<8x3xf32>,
    %c0_55 = arith.constant 0 : index
    %c256 = arith.constant 256 : index
    %193 = vector.load %arg11[%c0_55, %c256] : memref<8x384xf32, #tpu.memory_space<vmem>>, vector<2x4xf32>
    tpu.vector_store %arg11[%c0_55, %c256], %188 {strides = array<i32>} : memref<8x384xf32, #tpu.memory_space<vmem>>, vector<2x4xf32>,
    return
  }
}

</mosaic_0001>

<llo_original>
// kernel: patient2vec_forward.1
$region0: #{patient2vec_forward.1}
  #allocation0 [shape = 'u32[]', space=smem, size = 0x4, offset = 0x4, fixed_abs, tag = 'smem constant byte address 0x4 - core index']
  #allocation1 [shape = 'u32[144,128]{1,0:T(1,128)}', space=vmem, size = 0x12000, scoped, tag = 'internal scratch']
  %s0 = inlined_call_operand.vmem [shape: f32[8,16], index: 0, kind: input, shape index: {}]
  %s1 = inlined_call_operand.vmem [shape: f32[16,8], index: 1, kind: input, shape index: {}]
  %s2 = inlined_call_operand.vmem [shape: f32[8,16], index: 2, kind: input, shape index: {}]
  %s3 = inlined_call_operand.vmem [shape: f32[16,16], index: 3, kind: input, shape index: {}]
  %s4 = inlined_call_operand.vmem [shape: f32[16,96], index: 4, kind: input, shape index: {}]
  %s5 = inlined_call_operand.vmem [shape: f32[32,96], index: 5, kind: input, shape index: {}]
  %s6 = inlined_call_operand.vmem [shape: f32[32,3], index: 6, kind: input, shape index: {}]
  %s7 = inlined_call_operand.vmem [shape: f32[3,96], index: 7, kind: input, shape index: {}]
  %s8 = inlined_call_operand.vmem [shape: f32[2,8], index: 8, kind: input, shape index: {}]
  %s9 = inlined_call_operand.vmem [shape: f32[96,4], index: 9, kind: input, shape index: {}]
  %s10 = inlined_call_operand.vmem [shape: f32[8,96], index: 10, kind: input, shape index: {}]
  %s11 = inlined_call_operand.vmem [shape: f32[8,384], index: 11, kind: output, shape index: {}]
  %s12 = sld [smem:[#allocation0]]
  $region54: #{patient2vec_forward.1} parent=0
    _
  %s14 = ssub.s32 1, %s12
  %s15 = scalar_select 0, %s14, %s12
  // Predicated region
  $region2: #{patient2vec_forward.1} parent=0 // pred_check
    _
  $region3: #{patient2vec_forward.1} parent=0 // pred_check_branch
    %17 = sbr.rel (0) target = $region5
  $region4: #{patient2vec_forward.1} parent=0 // pred_region
    _
  $region5: #{patient2vec_forward.1} parent=0 // pred_fallthru
    _
  // Predicated region
  $region6: #{patient2vec_forward.1} parent=0 // pred_check
    _
  $region7: #{patient2vec_forward.1} parent=0 // pred_check_branch
    %19 = sbr.rel (0) target = $region9
  $region8: #{patient2vec_forward.1} parent=0 // pred_region
    _
  $region9: #{patient2vec_forward.1} parent=0 // pred_fallthru
    _
  // Predicated region
  $region10: #{patient2vec_forward.1} parent=0 // pred_check
    _
  $region11: #{patient2vec_forward.1} parent=0 // pred_check_branch
    %21 = sbr.rel (0) target = $region13
  $region12: #{patient2vec_forward.1} parent=0 // pred_region
    _
  $region13: #{patient2vec_forward.1} parent=0 // pred_fallthru
    _
  // Predicated region
  $region14: #{patient2vec_forward.1} parent=0 // pred_check
    _
  $region15: #{patient2vec_forward.1} parent=0 // pred_check_branch
    %23 = sbr.rel (0) target = $region17
  $region16: #{patient2vec_forward.1} parent=0 // pred_region
    _
  $region17: #{patient2vec_forward.1} parent=0 // pred_fallthru
    _
  // Predicated region
  $region18: #{patient2vec_forward.1} parent=0 // pred_check
    _
  $region19: #{patient2vec_forward.1} parent=0 // pred_check_branch
    %25 = sbr.rel (0) target = $region21
  $region20: #{patient2vec_forward.1} parent=0 // pred_region
    _
  $region21: #{patient2vec_forward.1} parent=0 // pred_fallthru
    _
  // Predicated region
  $region22: #{patient2vec_forward.1} parent=0 // pred_check
    _
  $region23: #{patient2vec_forward.1} parent=0 // pred_check_branch
    %27 = sbr.rel (0) target = $region25
  $region24: #{patient2vec_forward.1} parent=0 // pred_region
    _
  $region25: #{patient2vec_forward.1} parent=0 // pred_fallthru
    _
  // Predicated region
  $region26: #{patient2vec_forward.1} parent=0 // pred_check
    _
  $region27: #{patient2vec_forward.1} parent=0 // pred_check_branch
    %29 = sbr.rel (0) target = $region29
  $region28: #{patient2vec_forward.1} parent=0 // pred_region
    _
  $region29: #{patient2vec_forward.1} parent=0 // pred_fallthru
    _
  // Predicated region
  $region30: #{patient2vec_forward.1} parent=0 // pred_check
    _
  $region31: #{patient2vec_forward.1} parent=0 // pred_check_branch
    %31 = sbr.rel (0) target = $region33
  $region32: #{patient2vec_forward.1} parent=0 // pred_region
    _
  $region33: #{patient2vec_forward.1} parent=0 // pred_fallthru
    _
  // Predicated region
  $region34: #{patient2vec_forward.1} parent=0 // pred_check
    _
  $region35: #{patient2vec_forward.1} parent=0 // pred_check_branch
    %33 = sbr.rel (0) target = $region37
  $region36: #{patient2vec_forward.1} parent=0 // pred_region
    _
  $region37: #{patient2vec_forward.1} parent=0 // pred_fallthru
    _
  // Predicated region
  $region38: #{patient2vec_forward.1} parent=0 // pred_check
    _
  $region39: #{patient2vec_forward.1} parent=0 // pred_check_branch
    %35 = sbr.rel (0) target = $region41
  $region40: #{patient2vec_forward.1} parent=0 // pred_region
    _
  $region41: #{patient2vec_forward.1} parent=0 // pred_fallthru
    _
  // Predicated region
  $region42: #{patient2vec_forward.1} parent=0 // pred_check
    _
  $region43: #{patient2vec_forward.1} parent=0 // pred_check_branch
    %37 = sbr.rel (0) target = $region45
  $region44: #{patient2vec_forward.1} parent=0 // pred_region
    _
  $region45: #{patient2vec_forward.1} parent=0 // pred_fallthru
    _
  %v38 = vld [vmem:[%s0] sm:$0xff]
  %v39 = vld [vmem:[%s10] sm:$0xff]
  %v40 = vld [vmem:[%s1] sm:$0xff]
  %v41 = vld [vmem:[%s1 + $0x8] sm:$0xff]
  %v43 = vrot.slane %v39, 4
  %s44 = vtos %v43
  %v45 = vstv %s44
  %vm47 = vcmask 130048
  %v49 = vsel %vm47, %v38, 0
  %51 = vmatprep.subr.mxu0 0.0
  %52 = vmatpush1.msra.mxu0 %v40
  %53 = vmatprep.subr.mxu0 0.0
  %54 = vmatpush1.msra.mxu0 %v41
  %55 = vmatprep.subr.mxu0 0.0
  %56 = vmatpush1.msra.mxu0 0.0
  %57 = vmatprep.subr.mxu0 0.0
  %58 = vmatpush1.msra.mxu0 0.0
  %59 = vmatprep.subr.mxu0 0.0
  %60 = vmatpush1.msra.mxu0 0.0
  %61 = vmatprep.subr.mxu0 0.0
  %62 = vmatpush1.msra.mxu0 0.0
  %63 = vmatprep.subr.mxu0 0.0
  %64 = vmatpush1.msra.mxu0 0.0
  %65 = vmatprep.subr.mxu0 0.0
  %66 = vmatpush1.msra.mxu0 0.0
  %67 = vmatprep.subr.mxu0 0.0
  %68 = vmatpush1.msra.mxu0 0.0
  %69 = vmatprep.subr.mxu0 0.0
  %70 = vmatpush1.msra.mxu0 0.0
  %71 = vmatprep.subr.mxu0 0.0
  %72 = vmatpush1.msra.mxu0 0.0
  %73 = vmatprep.subr.mxu0 0.0
  %74 = vmatpush1.msra.mxu0 0.0
  %75 = vmatprep.subr.mxu0 0.0
  %76 = vmatpush1.msra.mxu0 0.0
  %77 = vmatprep.subr.mxu0 0.0
  %78 = vmatpush1.msra.mxu0 0.0
  %79 = vmatprep.subr.mxu0 0.0
  %80 = vmatpush1.msra.mxu0 0.0
  %81 = vmatprep.subr.mxu0 0.0
  %82 = vmatpush1.msra.mxu0 0.0
  %83 = vmatprep.subr.mxu0 0.0
  %84 = vmatpush1.msra.mxu0 0.0
  %85 = vmatprep.subr.mxu0 0.0
  %86 = vmatpush1.msra.mxu0 0.0
  %87 = vmatprep.subr.mxu0 0.0
  %88 = vmatpush1.msra.mxu0 0.0
  %89 = vmatprep.subr.mxu0 0.0
  %90 = vmatpush1.msra.mxu0 0.0
  %91 = vmatprep.subr.mxu0 0.0
  %92 = vmatpush1.msra.mxu0 0.0
  %93 = vmatprep.subr.mxu0 0.0
  %94 = vmatpush1.msra.mxu0 0.0
  %95 = vmatprep.subr.mxu0 0.0
  %96 = vmatpush1.msra.mxu0 0.0
  %97 = vmatprep.subr.mxu0 0.0
  %98 = vmatpush1.msra.mxu0 0.0
  %99 = vmatprep.subr.mxu0 0.0
  %100 = vmatpush1.msra.mxu0 0.0
  %101 = vmatprep.subr.mxu0 0.0
  %102 = vmatpush1.msra.mxu0 0.0
  %103 = vmatprep.subr.mxu0 0.0
  %104 = vmatpush1.msra.mxu0 0.0
  %105 = vmatprep.subr.mxu0 0.0
  %106 = vmatpush1.msra.mxu0 0.0
  %107 = vmatprep.subr.mxu0 0.0
  %108 = vmatpush1.msra.mxu0 0.0
  %109 = vmatprep.subr.mxu0 0.0
  %110 = vmatpush1.msra.mxu0 0.0
  %111 = vmatprep.subr.mxu0 0.0
  %112 = vmatpush1.msra.mxu0 0.0
  %113 = vmatprep.subr.mxu0 0.0
  %114 = vmatpush1.msra.mxu0 0.0
  %115 = vmatprep.mubr.f32.mxu0 0.0
  %116 = vmatmul.mubr.f32.gmra.mrb[0].mxu0 %v49
  %v117 = vpop.f32.mrb[0].mxu0
  %v118 = vadd.f32 %v45, %v117
  %v119 = vpop.f32.mrb[0].mxu0
  %120 = vdwg.mxu0
  %v121 = vmax.f32 %v118, 0.0
  %v122 = vmin.f32 %v121, 1.0
  %v123 = vld [vmem:[%s2] sm:$0xff]
  %vm124 = vcmask 64512
  %v126 = vsel %vm124, %v122, 0
  %128 = vmatprep.subr.mxu0 0.0
  %129 = vmatpush1.msra.mxu0 %v123
  %130 = vmatprep.subr.mxu0 0.0
  %131 = vmatpush1.msra.mxu0 0.0
  %132 = vmatprep.subr.mxu0 0.0
  %133 = vmatpush1.msra.mxu0 0.0
  %134 = vmatprep.subr.mxu0 0.0
  %135 = vmatpush1.msra.mxu0 0.0
  %136 = vmatprep.subr.mxu0 0.0
  %137 = vmatpush1.msra.mxu0 0.0
  %138 = vmatprep.subr.mxu0 0.0
  %139 = vmatpush1.msra.mxu0 0.0
  %140 = vmatprep.subr.mxu0 0.0
  %141 = vmatpush1.msra.mxu0 0.0
  %142 = vmatprep.subr.mxu0 0.0
  %143 = vmatpush1.msra.mxu0 0.0
  %144 = vmatprep.subr.mxu0 0.0
  %145 = vmatpush1.msra.mxu0 0.0
  %146 = vmatprep.subr.mxu0 0.0
  %147 = vmatpush1.msra.mxu0 0.0
  %148 = vmatprep.subr.mxu0 0.0
  %149 = vmatpush1.msra.mxu0 0.0
  %150 = vmatprep.subr.mxu0 0.0
  %151 = vmatpush1.msra.mxu0 0.0
  %152 = vmatprep.subr.mxu0 0.0
  %153 = vmatpush1.msra.mxu0 0.0
  %154 = vmatprep.subr.mxu0 0.0
  %155 = vmatpush1.msra.mxu0 0.0
  %156 = vmatprep.subr.mxu0 0.0
  %157 = vmatpush1.msra.mxu0 0.0
  %158 = vmatprep.subr.mxu0 0.0
  %159 = vmatpush1.msra.mxu0 0.0
  %160 = vmatprep.subr.mxu0 0.0
  %161 = vmatpush1.msra.mxu0 0.0
  %162 = vmatprep.subr.mxu0 0.0
  %163 = vmatpush1.msra.mxu0 0.0
  %164 = vmatprep.subr.mxu0 0.0
  %165 = vmatpush1.msra.mxu0 0.0
  %166 = vmatprep.subr.mxu0 0.0
  %167 = vmatpush1.msra.mxu0 0.0
  %168 = vmatprep.subr.mxu0 0.0
  %169 = vmatpush1.msra.mxu0 0.0
  %170 = vmatprep.subr.mxu0 0.0
  %171 = vmatpush1.msra.mxu0 0.0
  %172 = vmatprep.subr.mxu0 0.0
  %173 = vmatpush1.msra.mxu0 0.0
  %174 = vmatprep.subr.mxu0 0.0
  %175 = vmatpush1.msra.mxu0 0.0
  %176 = vmatprep.subr.mxu0 0.0
  %177 = vmatpush1.msra.mxu0 0.0
  %178 = vmatprep.subr.mxu0 0.0
  %179 = vmatpush1.msra.mxu0 0.0
  %180 = vmatprep.subr.mxu0 0.0
  %181 = vmatpush1.msra.mxu0 0.0
  %182 = vmatprep.subr.mxu0 0.0
  %183 = vmatpush1.msra.mxu0 0.0
  %184 = vmatprep.subr.mxu0 0.0
  %185 = vmatpush1.msra.mxu0 0.0
  %186 = vmatprep.subr.mxu0 0.0
  %187 = vmatpush1.msra.mxu0 0.0
  %188 = vmatprep.subr.mxu0 0.0
  %189 = vmatpush1.msra.mxu0 0.0
  %190 = vmatprep.subr.mxu0 0.0
  %191 = vmatpush1.msra.mxu0 0.0
  %192 = vmatprep.mubr.f32.mxu0 0.0
  %193 = vmatmul.mubr.f32.gmra.mrb[0].mxu0 %v126
  %v194 = vpop.f32.mrb[0].mxu0
  %v195 = vadd.f32 0.0, %v194
  %v196 = vpop.f32.mrb[0].mxu0
  %197 = vdwg.mxu0
  %v198 = vmul.f32 %v195, %v38
  %v199 = vld [vmem:[%s3] sm:$0xff]
  %v200 = vld [vmem:[%s3 + $0x8] sm:$0xff]
  %v202 = vsel %vm47, %v198, 0
  %204 = vmatprep.subr.mxu0 0.0
  %205 = vmatpush1.msra.mxu0 %v199
  %206 = vmatprep.subr.mxu0 0.0
  %207 = vmatpush1.msra.mxu0 %v200
  %208 = vmatprep.subr.mxu0 0.0
  %209 = vmatpush1.msra.mxu0 0.0
  %210 = vmatprep.subr.mxu0 0.0
  %211 = vmatpush1.msra.mxu0 0.0
  %212 = vmatprep.subr.mxu0 0.0
  %213 = vmatpush1.msra.mxu0 0.0
  %214 = vmatprep.subr.mxu0 0.0
  %215 = vmatpush1.msra.mxu0 0.0
  %216 = vmatprep.subr.mxu0 0.0
  %217 = vmatpush1.msra.mxu0 0.0
  %218 = vmatprep.subr.mxu0 0.0
  %219 = vmatpush1.msra.mxu0 0.0
  %220 = vmatprep.subr.mxu0 0.0
  %221 = vmatpush1.msra.mxu0 0.0
  %222 = vmatprep.subr.mxu0 0.0
  %223 = vmatpush1.msra.mxu0 0.0
  %224 = vmatprep.subr.mxu0 0.0
  %225 = vmatpush1.msra.mxu0 0.0
  %226 = vmatprep.subr.mxu0 0.0
  %227 = vmatpush1.msra.mxu0 0.0
  %228 = vmatprep.subr.mxu0 0.0
  %229 = vmatpush1.msra.mxu0 0.0
  %230 = vmatprep.subr.mxu0 0.0
  %231 = vmatpush1.msra.mxu0 0.0
  %232 = vmatprep.subr.mxu0 0.0
  %233 = vmatpush1.msra.mxu0 0.0
  %234 = vmatprep.subr.mxu0 0.0
  %235 = vmatpush1.msra.mxu0 0.0
  %236 = vmatprep.subr.mxu0 0.0
  %237 = vmatpush1.msra.mxu0 0.0
  %238 = vmatprep.subr.mxu0 0.0
  %239 = vmatpush1.msra.mxu0 0.0
  %240 = vmatprep.subr.mxu0 0.0
  %241 = vmatpush1.msra.mxu0 0.0
  %242 = vmatprep.subr.mxu0 0.0
  %243 = vmatpush1.msra.mxu0 0.0
  %244 = vmatprep.subr.mxu0 0.0
  %245 = vmatpush1.msra.mxu0 0.0
  %246 = vmatprep.subr.mxu0 0.0
  %247 = vmatpush1.msra.mxu0 0.0
  %248 = vmatprep.subr.mxu0 0.0
  %249 = vmatpush1.msra.mxu0 0.0
  %250 = vmatprep.subr.mxu0 0.0
  %251 = vmatpush1.msra.mxu0 0.0
  %252 = vmatprep.subr.mxu0 0.0
  %253 = vmatpush1.msra.mxu0 0.0
  %254 = vmatprep.subr.mxu0 0.0
  %255 = vmatpush1.msra.mxu0 0.0
  %256 = vmatprep.subr.mxu0 0.0
  %257 = vmatpush1.msra.mxu0 0.0
  %258 = vmatprep.subr.mxu0 0.0
  %259 = vmatpush1.msra.mxu0 0.0
  %260 = vmatprep.subr.mxu0 0.0
  %261 = vmatpush1.msra.mxu0 0.0
  %262 = vmatprep.subr.mxu0 0.0
  %263 = vmatpush1.msra.mxu0 0.0
  %264 = vmatprep.subr.mxu0 0.0
  %265 = vmatpush1.msra.mxu0 0.0
  %266 = vmatprep.subr.mxu0 0.0
  %267 = vmatpush1.msra.mxu0 0.0
  %268 = vmatprep.mubr.f32.mxu0 0.0
  %269 = vmatmul.mubr.f32.gmra.mrb[0].mxu0 %v202
  %v270 = vpop.f32.mrb[0].mxu0
  %v271 = vadd.f32 0.0, %v270
  %v272 = vpop.f32.mrb[0].mxu0
  %273 = vdwg.mxu0
  %v274 = vld [vmem:[%s4] sm:$0xff]
  %v275 = vld [vmem:[%s4 + $0x8] sm:$0xff]
  %v276 = vlaneseq
  %v277 = vshrl.u32 %v276, 7
  %v278 = vsub.s32 0, %v277
  %v279 = vrot.slane %v39, %v278
  %v281 = vsel %vm47, %v271, 0
  %283 = vmatprep.subr.mxu0 0.0
  %284 = vmatpush1.msra.mxu0 %v274
  %285 = vmatprep.subr.mxu0 0.0
  %286 = vmatpush1.msra.mxu0 %v275
  %287 = vmatprep.subr.mxu0 0.0
  %288 = vmatpush1.msra.mxu0 0.0
  %289 = vmatprep.subr.mxu0 0.0
  %290 = vmatpush1.msra.mxu0 0.0
  %291 = vmatprep.subr.mxu0 0.0
  %292 = vmatpush1.msra.mxu0 0.0
  %293 = vmatprep.subr.mxu0 0.0
  %294 = vmatpush1.msra.mxu0 0.0
  %295 = vmatprep.subr.mxu0 0.0
  %296 = vmatpush1.msra.mxu0 0.0
  %297 = vmatprep.subr.mxu0 0.0
  %298 = vmatpush1.msra.mxu0 0.0
  %299 = vmatprep.subr.mxu0 0.0
  %300 = vmatpush1.msra.mxu0 0.0
  %301 = vmatprep.subr.mxu0 0.0
  %302 = vmatpush1.msra.mxu0 0.0
  %303 = vmatprep.subr.mxu0 0.0
  %304 = vmatpush1.msra.mxu0 0.0
  %305 = vmatprep.subr.mxu0 0.0
  %306 = vmatpush1.msra.mxu0 0.0
  %307 = vmatprep.subr.mxu0 0.0
  %308 = vmatpush1.msra.mxu0 0.0
  %309 = vmatprep.subr.mxu0 0.0
  %310 = vmatpush1.msra.mxu0 0.0
  %311 = vmatprep.subr.mxu0 0.0
  %312 = vmatpush1.msra.mxu0 0.0
  %313 = vmatprep.subr.mxu0 0.0
  %314 = vmatpush1.msra.mxu0 0.0
  %315 = vmatprep.subr.mxu0 0.0
  %316 = vmatpush1.msra.mxu0 0.0
  %317 = vmatprep.subr.mxu0 0.0
  %318 = vmatpush1.msra.mxu0 0.0
  %319 = vmatprep.subr.mxu0 0.0
  %320 = vmatpush1.msra.mxu0 0.0
  %321 = vmatprep.subr.mxu0 0.0
  %322 = vmatpush1.msra.mxu0 0.0
  %323 = vmatprep.subr.mxu0 0.0
  %324 = vmatpush1.msra.mxu0 0.0
  %325 = vmatprep.subr.mxu0 0.0
  %326 = vmatpush1.msra.mxu0 0.0
  %327 = vmatprep.subr.mxu0 0.0
  %328 = vmatpush1.msra.mxu0 0.0
  %329 = vmatprep.subr.mxu0 0.0
  %330 = vmatpush1.msra.mxu0 0.0
  %331 = vmatprep.subr.mxu0 0.0
  %332 = vmatpush1.msra.mxu0 0.0
  %333 = vmatprep.subr.mxu0 0.0
  %334 = vmatpush1.msra.mxu0 0.0
  %335 = vmatprep.subr.mxu0 0.0
  %336 = vmatpush1.msra.mxu0 0.0
  %337 = vmatprep.subr.mxu0 0.0
  %338 = vmatpush1.msra.mxu0 0.0
  %339 = vmatprep.subr.mxu0 0.0
  %340 = vmatpush1.msra.mxu0 0.0
  %341 = vmatprep.subr.mxu0 0.0
  %342 = vmatpush1.msra.mxu0 0.0
  %343 = vmatprep.subr.mxu0 0.0
  %344 = vmatpush1.msra.mxu0 0.0
  %345 = vmatprep.subr.mxu0 0.0
  %346 = vmatpush1.msra.mxu0 0.0
  %347 = vmatprep.mubr.f32.mxu0 0.0
  %348 = vmatmul.mubr.f32.gmra.mrb[0].mxu0 %v281
  %v349 = vpop.f32.mrb[0].mxu0
  %v350 = vadd.f32 %v279, %v349
  %v351 = vpop.f32.mrb[0].mxu0
  %352 = vdwg.mxu0
  %v353 = vld [vmem:[%s5] sm:$0xff]
  %v354 = vld [vmem:[%s5 + $0x8] sm:$0xff]
  %v355 = vld [vmem:[%s5 + $0x10] sm:$0xff]
  %v356 = vld [vmem:[%s5 + $0x18] sm:$0xff]
  %vm357 = vcmask 261120
  %v359 = vsel %vm357, 0.0, 0
  %361 = vmatprep.subr.mxu0 0.0
  %362 = vmatpush1.msra.mxu0 %v353
  %363 = vmatprep.subr.mxu0 0.0
  %364 = vmatpush1.msra.mxu0 %v354
  %365 = vmatprep.subr.mxu0 0.0
  %366 = vmatpush1.msra.mxu0 %v355
  %367 = vmatprep.subr.mxu0 0.0
  %368 = vmatpush1.msra.mxu0 %v356
  %369 = vmatprep.subr.mxu0 0.0
  %370 = vmatpush1.msra.mxu0 0.0
  %371 = vmatprep.subr.mxu0 0.0
  %372 = vmatpush1.msra.mxu0 0.0
  %373 = vmatprep.subr.mxu0 0.0
  %374 = vmatpush1.msra.mxu0 0.0
  %375 = vmatprep.subr.mxu0 0.0
  %376 = vmatpush1.msra.mxu0 0.0
  %377 = vmatprep.subr.mxu0 0.0
  %378 = vmatpush1.msra.mxu0 0.0
  %379 = vmatprep.subr.mxu0 0.0
  %380 = vmatpush1.msra.mxu0 0.0
  %381 = vmatprep.subr.mxu0 0.0
  %382 = vmatpush1.msra.mxu0 0.0
  %383 = vmatprep.subr.mxu0 0.0
  %384 = vmatpush1.msra.mxu0 0.0
  %385 = vmatprep.subr.mxu0 0.0
  %386 = vmatpush1.msra.mxu0 0.0
  %387 = vmatprep.subr.mxu0 0.0
  %388 = vmatpush1.msra.mxu0 0.0
  %389 = vmatprep.subr.mxu0 0.0
  %390 = vmatpush1.msra.mxu0 0.0
  %391 = vmatprep.subr.mxu0 0.0
  %392 = vmatpush1.msra.mxu0 0.0
  %393 = vmatprep.subr.mxu0 0.0
  %394 = vmatpush1.msra.mxu0 0.0
  %395 = vmatprep.subr.mxu0 0.0
  %396 = vmatpush1.msra.mxu0 0.0
  %397 = vmatprep.subr.mxu0 0.0
  %398 = vmatpush1.msra.mxu0 0.0
  %399 = vmatprep.subr.mxu0 0.0
  %400 = vmatpush1.msra.mxu0 0.0
  %401 = vmatprep.subr.mxu0 0.0
  %402 = vmatpush1.msra.mxu0 0.0
  %403 = vmatprep.subr.mxu0 0.0
  %404 = vmatpush1.msra.mxu0 0.0
  %405 = vmatprep.subr.mxu0 0.0
  %406 = vmatpush1.msra.mxu0 0.0
  %407 = vmatprep.subr.mxu0 0.0
  %408 = vmatpush1.msra.mxu0 0.0
  %409 = vmatprep.subr.mxu0 0.0
  %410 = vmatpush1.msra.mxu0 0.0
  %411 = vmatprep.subr.mxu0 0.0
  %412 = vmatpush1.msra.mxu0 0.0
  %413 = vmatprep.subr.mxu0 0.0
  %414 = vmatpush1.msra.mxu0 0.0
  %415 = vmatprep.subr.mxu0 0.0
  %416 = vmatpush1.msra.mxu0 0.0
  %417 = vmatprep.subr.mxu0 0.0
  %418 = vmatpush1.msra.mxu0 0.0
  %419 = vmatprep.subr.mxu0 0.0
  %420 = vmatpush1.msra.mxu0 0.0
  %421 = vmatprep.subr.mxu0 0.0
  %422 = vmatpush1.msra.mxu0 0.0
  %423 = vmatprep.subr.mxu0 0.0
  %424 = vmatpush1.msra.mxu0 0.0
  %425 = vmatprep.mubr.f32.mxu0 0.0
  %426 = vmatmul.mubr.f32.gmra.mrb[0].mxu0 %v359
  %v427 = vpop.f32.mrb[0].mxu0
  %v428 = vadd.f32 0.0, %v427
  %v429 = vpop.f32.mrb[0].mxu0
  %430 = vdwg.mxu0
  %v431 = vadd.f32 %v350, %v428
  %v432 = vxor.u32 %v431, 2147483648
  %v433 = vmul.f32 %v432, 1.442695
  %v434 = vpow.pop %v433
  %v435 = vadd.f32 %v434, 1.0
  %v436 = vrcp.pop %v435
  %v437 = vmul.f32 1.0, %v436
  %v438 = vlaneseq
  %v439 = vshrl.u32 %v438, 7
  %v440 = vsub.s32 1, %v439
  %v441 = vrot.slane %v39, %v440
  %443 = vrot.lane.b32.xlu0 %v441, 64
  %v444 = vpop.permute.xlu0 %443
  %v446 = vadd.f32 %v428, %v444
  %448 = vrot.lane.b32.xlu0 %v446, 64
  %v449 = vpop.permute.xlu0 %448
  %v451 = vmul.f32 %v437, %v449
  %453 = vrot.lane.b32.xlu0 %v451, 64
  %v454 = vpop.permute.xlu0 %453
  %v456 = vadd.f32 %v350, %v454
  %v457 = vtanh.pop %v456
  %v458 = vsub.f32 1.0, %v437
  %460 = vrot.lane.b32.xlu0 %v457, 96
  %v461 = vpop.permute.xlu0 %460
  %v463 = vmul.f32 %v458, %v461
  %v464 = vmul.f32 %v437, 0.0
  %v465 = vadd.f32 %v463, %v464
  %467 = vrot.lane.b32.xlu0 %v465, 96
  %v468 = vpop.permute.xlu0 %467
  %v469 = vsel %vm357, %v468, 0
  %471 = vmatprep.subr.mxu0 0.0
  %472 = vmatpush1.msra.mxu0 %v353
  %473 = vmatprep.subr.mxu0 0.0
  %474 = vmatpush1.msra.mxu0 %v354
  %475 = vmatprep.subr.mxu0 0.0
  %476 = vmatpush1.msra.mxu0 %v355
  %477 = vmatprep.subr.mxu0 0.0
  %478 = vmatpush1.msra.mxu0 %v356
  %479 = vmatprep.subr.mxu0 0.0
  %480 = vmatpush1.msra.mxu0 0.0
  %481 = vmatprep.subr.mxu0 0.0
  %482 = vmatpush1.msra.mxu0 0.0
  %483 = vmatprep.subr.mxu0 0.0
  %484 = vmatpush1.msra.mxu0 0.0
  %485 = vmatprep.subr.mxu0 0.0
  %486 = vmatpush1.msra.mxu0 0.0
  %487 = vmatprep.subr.mxu0 0.0
  %488 = vmatpush1.msra.mxu0 0.0
  %489 = vmatprep.subr.mxu0 0.0
  %490 = vmatpush1.msra.mxu0 0.0
  %491 = vmatprep.subr.mxu0 0.0
  %492 = vmatpush1.msra.mxu0 0.0
  %493 = vmatprep.subr.mxu0 0.0
  %494 = vmatpush1.msra.mxu0 0.0
  %495 = vmatprep.subr.mxu0 0.0
  %496 = vmatpush1.msra.mxu0 0.0
  %497 = vmatprep.subr.mxu0 0.0
  %498 = vmatpush1.msra.mxu0 0.0
  %499 = vmatprep.subr.mxu0 0.0
  %500 = vmatpush1.msra.mxu0 0.0
  %501 = vmatprep.subr.mxu0 0.0
  %502 = vmatpush1.msra.mxu0 0.0
  %503 = vmatprep.subr.mxu0 0.0
  %504 = vmatpush1.msra.mxu0 0.0
  %505 = vmatprep.subr.mxu0 0.0
  %506 = vmatpush1.msra.mxu0 0.0
  %507 = vmatprep.subr.mxu0 0.0
  %508 = vmatpush1.msra.mxu0 0.0
  %509 = vmatprep.subr.mxu0 0.0
  %510 = vmatpush1.msra.mxu0 0.0
  %511 = vmatprep.subr.mxu0 0.0
  %512 = vmatpush1.msra.mxu0 0.0
  %513 = vmatprep.subr.mxu0 0.0
  %514 = vmatpush1.msra.mxu0 0.0
  %515 = vmatprep.subr.mxu0 0.0
  %516 = vmatpush1.msra.mxu0 0.0
  %517 = vmatprep.subr.mxu0 0.0
  %518 = vmatpush1.msra.mxu0 0.0
  %519 = vmatprep.subr.mxu0 0.0
  %520 = vmatpush1.msra.mxu0 0.0
  %521 = vmatprep.subr.mxu0 0.0
  %522 = vmatpush1.msra.mxu0 0.0
  %523 = vmatprep.subr.mxu0 0.0
  %524 = vmatpush1.msra.mxu0 0.0
  %525 = vmatprep.subr.mxu0 0.0
  %526 = vmatpush1.msra.mxu0 0.0
  %527 = vmatprep.subr.mxu0 0.0
  %528 = vmatpush1.msra.mxu0 0.0
  %529 = vmatprep.subr.mxu0 0.0
  %530 = vmatpush1.msra.mxu0 0.0
  %531 = vmatprep.subr.mxu0 0.0
  %532 = vmatpush1.msra.mxu0 0.0
  %533 = vmatprep.subr.mxu0 0.0
  %534 = vmatpush1.msra.mxu0 0.0
  %535 = vmatprep.mubr.f32.mxu0 0.0
  %536 = vmatmul.mubr.f32.gmra.mrb[0].mxu0 %v469
  %v537 = vpop.f32.mrb[0].mxu0
  %v538 = vadd.f32 0.0, %v537
  %v539 = vpop.f32.mrb[0].mxu0
  %540 = vdwg.mxu0
  %v542 = vrot.slane %v538, 6
  %v544 = vadd.f32 %v350, %v542
  %v545 = vxor.u32 %v544, 2147483648
  %v546 = vmul.f32 %v545, 1.442695
  %v547 = vpow.pop %v546
  %v548 = vadd.f32 %v547, 1.0
  %v549 = vrcp.pop %v548
  %v550 = vmul.f32 1.0, %v549
  %v551 = vadd.f32 %v538, %v444
  %v553 = vrot.slane %v551, 6
  %554 = vrot.lane.b32.xlu0 %v553, 64
  %v555 = vpop.permute.xlu0 %554
  %v557 = vmul.f32 %v550, %v555
  %559 = vrot.lane.b32.xlu0 %v557, 64
  %v560 = vpop.permute.xlu0 %559
  %v562 = vadd.f32 %v350, %v560
  %v563 = vtanh.pop %v562
  %v564 = vsub.f32 1.0, %v550
  %566 = vrot.lane.b32.xlu0 %v563, 96
  %v567 = vpop.permute.xlu0 %566
  %v569 = vmul.f32 %v564, %v567
  %v570 = vrot.slane %v465, 6
  %v572 = vmul.f32 %v550, %v570
  %v573 = vadd.f32 %v569, %v572
  %v575 = vrot.slane %v573, 2
  %576 = vrot.lane.b32.xlu0 %v575, 96
  %v577 = vpop.permute.xlu0 %576
  %v578 = vsel %vm357, %v577, 0
  %580 = vmatprep.subr.mxu0 0.0
  %581 = vmatpush1.msra.mxu0 %v353
  %582 = vmatprep.subr.mxu0 0.0
  %583 = vmatpush1.msra.mxu0 %v354
  %584 = vmatprep.subr.mxu0 0.0
  %585 = vmatpush1.msra.mxu0 %v355
  %586 = vmatprep.subr.mxu0 0.0
  %587 = vmatpush1.msra.mxu0 %v356
  %588 = vmatprep.subr.mxu0 0.0
  %589 = vmatpush1.msra.mxu0 0.0
  %590 = vmatprep.subr.mxu0 0.0
  %591 = vmatpush1.msra.mxu0 0.0
  %592 = vmatprep.subr.mxu0 0.0
  %593 = vmatpush1.msra.mxu0 0.0
  %594 = vmatprep.subr.mxu0 0.0
  %595 = vmatpush1.msra.mxu0 0.0
  %596 = vmatprep.subr.mxu0 0.0
  %597 = vmatpush1.msra.mxu0 0.0
  %598 = vmatprep.subr.mxu0 0.0
  %599 = vmatpush1.msra.mxu0 0.0
  %600 = vmatprep.subr.mxu0 0.0
  %601 = vmatpush1.msra.mxu0 0.0
  %602 = vmatprep.subr.mxu0 0.0
  %603 = vmatpush1.msra.mxu0 0.0
  %604 = vmatprep.subr.mxu0 0.0
  %605 = vmatpush1.msra.mxu0 0.0
  %606 = vmatprep.subr.mxu0 0.0
  %607 = vmatpush1.msra.mxu0 0.0
  %608 = vmatprep.subr.mxu0 0.0
  %609 = vmatpush1.msra.mxu0 0.0
  %610 = vmatprep.subr.mxu0 0.0
  %611 = vmatpush1.msra.mxu0 0.0
  %612 = vmatprep.subr.mxu0 0.0
  %613 = vmatpush1.msra.mxu0 0.0
  %614 = vmatprep.subr.mxu0 0.0
  %615 = vmatpush1.msra.mxu0 0.0
  %616 = vmatprep.subr.mxu0 0.0
  %617 = vmatpush1.msra.mxu0 0.0
  %618 = vmatprep.subr.mxu0 0.0
  %619 = vmatpush1.msra.mxu0 0.0
  %620 = vmatprep.subr.mxu0 0.0
  %621 = vmatpush1.msra.mxu0 0.0
  %622 = vmatprep.subr.mxu0 0.0
  %623 = vmatpush1.msra.mxu0 0.0
  %624 = vmatprep.subr.mxu0 0.0
  %625 = vmatpush1.msra.mxu0 0.0
  %626 = vmatprep.subr.mxu0 0.0
  %627 = vmatpush1.msra.mxu0 0.0
  %628 = vmatprep.subr.mxu0 0.0
  %629 = vmatpush1.msra.mxu0 0.0
  %630 = vmatprep.subr.mxu0 0.0
  %631 = vmatpush1.msra.mxu0 0.0
  %632 = vmatprep.subr.mxu0 0.0
  %633 = vmatpush1.msra.mxu0 0.0
  %634 = vmatprep.subr.mxu0 0.0
  %635 = vmatpush1.msra.mxu0 0.0
  %636 = vmatprep.subr.mxu0 0.0
  %637 = vmatpush1.msra.mxu0 0.0
  %638 = vmatprep.subr.mxu0 0.0
  %639 = vmatpush1.msra.mxu0 0.0
  %640 = vmatprep.subr.mxu0 0.0
  %641 = vmatpush1.msra.mxu0 0.0
  %642 = vmatprep.subr.mxu0 0.0
  %643 = vmatpush1.msra.mxu0 0.0
  %644 = vmatprep.mubr.f32.mxu0 0.0
  %645 = vmatmul.mubr.f32.gmra.mrb[0].mxu0 %v578
  %v646 = vpop.f32.mrb[0].mxu0
  %v647 = vadd.f32 0.0, %v646
  %v648 = vpop.f32.mrb[0].mxu0
  %649 = vdwg.mxu0
  %v651 = vrot.slane %v647, 4
  %v653 = vadd.f32 %v350, %v651
  %v654 = vxor.u32 %v653, 2147483648
  %v655 = vmul.f32 %v654, 1.442695
  %v656 = vpow.pop %v655
  %v657 = vadd.f32 %v656, 1.0
  %v658 = vrcp.pop %v657
  %v659 = vmul.f32 1.0, %v658
  %v660 = vadd.f32 %v647, %v444
  %v662 = vrot.slane %v660, 4
  %663 = vrot.lane.b32.xlu0 %v662, 64
  %v664 = vpop.permute.xlu0 %663
  %v666 = vmul.f32 %v659, %v664
  %668 = vrot.lane.b32.xlu0 %v666, 64
  %v669 = vpop.permute.xlu0 %668
  %v671 = vadd.f32 %v350, %v669
  %v672 = vtanh.pop %v671
  %v673 = vsub.f32 1.0, %v659
  %675 = vrot.lane.b32.xlu0 %v672, 96
  %v676 = vpop.permute.xlu0 %675
  %v678 = vmul.f32 %v673, %v676
  %v679 = vrot.slane %v573, 6
  %v681 = vmul.f32 %v659, %v679
  %v682 = vadd.f32 %v678, %v681
  %v684 = vrot.slane %v682, 4
  %685 = vrot.lane.b32.xlu0 %v684, 96
  %v686 = vpop.permute.xlu0 %685
  %v687 = vsel %vm357, %v686, 0
  %689 = vmatprep.subr.mxu0 0.0
  %690 = vmatpush1.msra.mxu0 %v353
  %691 = vmatprep.subr.mxu0 0.0
  %692 = vmatpush1.msra.mxu0 %v354
  %693 = vmatprep.subr.mxu0 0.0
  %694 = vmatpush1.msra.mxu0 %v355
  %695 = vmatprep.subr.mxu0 0.0
  %696 = vmatpush1.msra.mxu0 %v356
  %697 = vmatprep.subr.mxu0 0.0
  %698 = vmatpush1.msra.mxu0 0.0
  %699 = vmatprep.subr.mxu0 0.0
  %700 = vmatpush1.msra.mxu0 0.0
  %701 = vmatprep.subr.mxu0 0.0
  %702 = vmatpush1.msra.mxu0 0.0
  %703 = vmatprep.subr.mxu0 0.0
  %704 = vmatpush1.msra.mxu0 0.0
  %705 = vmatprep.subr.mxu0 0.0
  %706 = vmatpush1.msra.mxu0 0.0
  %707 = vmatprep.subr.mxu0 0.0
  %708 = vmatpush1.msra.mxu0 0.0
  %709 = vmatprep.subr.mxu0 0.0
  %710 = vmatpush1.msra.mxu0 0.0
  %711 = vmatprep.subr.mxu0 0.0
  %712 = vmatpush1.msra.mxu0 0.0
  %713 = vmatprep.subr.mxu0 0.0
  %714 = vmatpush1.msra.mxu0 0.0
  %715 = vmatprep.subr.mxu0 0.0
  %716 = vmatpush1.msra.mxu0 0.0
  %717 = vmatprep.subr.mxu0 0.0
  %718 = vmatpush1.msra.mxu0 0.0
  %719 = vmatprep.subr.mxu0 0.0
  %720 = vmatpush1.msra.mxu0 0.0
  %721 = vmatprep.subr.mxu0 0.0
  %722 = vmatpush1.msra.mxu0 0.0
  %723 = vmatprep.subr.mxu0 0.0
  %724 = vmatpush1.msra.mxu0 0.0
  %725 = vmatprep.subr.mxu0 0.0
  %726 = vmatpush1.msra.mxu0 0.0
  %727 = vmatprep.subr.mxu0 0.0
  %728 = vmatpush1.msra.mxu0 0.0
  %729 = vmatprep.subr.mxu0 0.0
  %730 = vmatpush1.msra.mxu0 0.0
  %731 = vmatprep.subr.mxu0 0.0
  %732 = vmatpush1.msra.mxu0 0.0
  %733 = vmatprep.subr.mxu0 0.0
  %734 = vmatpush1.msra.mxu0 0.0
  %735 = vmatprep.subr.mxu0 0.0
  %736 = vmatpush1.msra.mxu0 0.0
  %737 = vmatprep.subr.mxu0 0.0
  %738 = vmatpush1.msra.mxu0 0.0
  %739 = vmatprep.subr.mxu0 0.0
  %740 = vmatpush1.msra.mxu0 0.0
  %741 = vmatprep.subr.mxu0 0.0
  %742 = vmatpush1.msra.mxu0 0.0
  %743 = vmatprep.subr.mxu0 0.0
  %744 = vmatpush1.msra.mxu0 0.0
  %745 = vmatprep.subr.mxu0 0.0
  %746 = vmatpush1.msra.mxu0 0.0
  %747 = vmatprep.subr.mxu0 0.0
  %748 = vmatpush1.msra.mxu0 0.0
  %749 = vmatprep.subr.mxu0 0.0
  %750 = vmatpush1.msra.mxu0 0.0
  %751 = vmatprep.subr.mxu0 0.0
  %752 = vmatpush1.msra.mxu0 0.0
  %753 = vmatprep.mubr.f32.mxu0 0.0
  %754 = vmatmul.mubr.f32.gmra.mrb[0].mxu0 %v687
  %v755 = vpop.f32.mrb[0].mxu0
  %v756 = vadd.f32 0.0, %v755
  %v757 = vpop.f32.mrb[0].mxu0
  %758 = vdwg.mxu0
  %v760 = vrot.slane %v756, 2
  %v762 = vadd.f32 %v350, %v760
  %v763 = vxor.u32 %v762, 2147483648
  %v764 = vmul.f32 %v763, 1.442695
  %v765 = vpow.pop %v764
  %v766 = vadd.f32 %v765, 1.0
  %v767 = vrcp.pop %v766
  %v768 = vmul.f32 1.0, %v767
  %v769 = vadd.f32 %v756, %v444
  %v771 = vrot.slane %v769, 2
  %772 = vrot.lane.b32.xlu0 %v771, 64
  %v773 = vpop.permute.xlu0 %772
  %v775 = vmul.f32 %v768, %v773
  %777 = vrot.lane.b32.xlu0 %v775, 64
  %v778 = vpop.permute.xlu0 %777
  %v780 = vadd.f32 %v350, %v778
  %v781 = vtanh.pop %v780
  %v782 = vsub.f32 1.0, %v768
  %784 = vrot.lane.b32.xlu0 %v781, 96
  %v785 = vpop.permute.xlu0 %784
  %v787 = vmul.f32 %v782, %v785
  %v788 = vrot.slane %v682, 6
  %v790 = vmul.f32 %v768, %v788
  %v791 = vadd.f32 %v787, %v790
  %vm792 = vcmask 1041408
  %v793 = vsel %vm792, %v465, %v573
  %vm794 = vcmask 1043456
  %v795 = vsel %vm794, %v793, %v682
  %vm796 = vcmask 1045504
  %v797 = vsel %vm796, %v795, %v791
  %v798 = vld [vmem:[%s6] sm:$0xff]
  %v799 = vld [vmem:[%s6 + $0x8] sm:$0xff]
  %v800 = vld [vmem:[%s6 + $0x10] sm:$0xff]
  %v801 = vld [vmem:[%s6 + $0x18] sm:$0xff]
  %v802 = vlaneseq
  %v803 = vshrl.u32 %v802, 7
  %v804 = vsub.s32 2, %v803
  %v805 = vrot.slane %v39, %v804
  %807 = vrot.lane.b32.xlu0 %v797, 96
  %v808 = vpop.permute.xlu0 %807
  %v809 = vsel %vm357, %v808, 0
  %811 = vmatprep.subr.mxu0 0.0
  %812 = vmatpush1.msra.mxu0 %v798
  %813 = vmatprep.subr.mxu0 0.0
  %814 = vmatpush1.msra.mxu0 %v799
  %815 = vmatprep.subr.mxu0 0.0
  %816 = vmatpush1.msra.mxu0 %v800
  %817 = vmatprep.subr.mxu0 0.0
  %818 = vmatpush1.msra.mxu0 %v801
  %819 = vmatprep.subr.mxu0 0.0
  %820 = vmatpush1.msra.mxu0 0.0
  %821 = vmatprep.subr.mxu0 0.0
  %822 = vmatpush1.msra.mxu0 0.0
  %823 = vmatprep.subr.mxu0 0.0
  %824 = vmatpush1.msra.mxu0 0.0
  %825 = vmatprep.subr.mxu0 0.0
  %826 = vmatpush1.msra.mxu0 0.0
  %827 = vmatprep.subr.mxu0 0.0
  %828 = vmatpush1.msra.mxu0 0.0
  %829 = vmatprep.subr.mxu0 0.0
  %830 = vmatpush1.msra.mxu0 0.0
  %831 = vmatprep.subr.mxu0 0.0
  %832 = vmatpush1.msra.mxu0 0.0
  %833 = vmatprep.subr.mxu0 0.0
  %834 = vmatpush1.msra.mxu0 0.0
  %835 = vmatprep.subr.mxu0 0.0
  %836 = vmatpush1.msra.mxu0 0.0
  %837 = vmatprep.subr.mxu0 0.0
  %838 = vmatpush1.msra.mxu0 0.0
  %839 = vmatprep.subr.mxu0 0.0
  %840 = vmatpush1.msra.mxu0 0.0
  %841 = vmatprep.subr.mxu0 0.0
  %842 = vmatpush1.msra.mxu0 0.0
  %843 = vmatprep.subr.mxu0 0.0
  %844 = vmatpush1.msra.mxu0 0.0
  %845 = vmatprep.subr.mxu0 0.0
  %846 = vmatpush1.msra.mxu0 0.0
  %847 = vmatprep.subr.mxu0 0.0
  %848 = vmatpush1.msra.mxu0 0.0
  %849 = vmatprep.subr.mxu0 0.0
  %850 = vmatpush1.msra.mxu0 0.0
  %851 = vmatprep.subr.mxu0 0.0
  %852 = vmatpush1.msra.mxu0 0.0
  %853 = vmatprep.subr.mxu0 0.0
  %854 = vmatpush1.msra.mxu0 0.0
  %855 = vmatprep.subr.mxu0 0.0
  %856 = vmatpush1.msra.mxu0 0.0
  %857 = vmatprep.subr.mxu0 0.0
  %858 = vmatpush1.msra.mxu0 0.0
  %859 = vmatprep.subr.mxu0 0.0
  %860 = vmatpush1.msra.mxu0 0.0
  %861 = vmatprep.subr.mxu0 0.0
  %862 = vmatpush1.msra.mxu0 0.0
  %863 = vmatprep.subr.mxu0 0.0
  %864 = vmatpush1.msra.mxu0 0.0
  %865 = vmatprep.subr.mxu0 0.0
  %866 = vmatpush1.msra.mxu0 0.0
  %867 = vmatprep.subr.mxu0 0.0
  %868 = vmatpush1.msra.mxu0 0.0
  %869 = vmatprep.subr.mxu0 0.0
  %870 = vmatpush1.msra.mxu0 0.0
  %871 = vmatprep.subr.mxu0 0.0
  %872 = vmatpush1.msra.mxu0 0.0
  %873 = vmatprep.subr.mxu0 0.0
  %874 = vmatpush1.msra.mxu0 0.0
  %875 = vmatprep.mubr.f32.mxu0 0.0
  %876 = vmatmul.mubr.f32.gmra.mrb[0].mxu0 %v809
  %v877 = vpop.f32.mrb[0].mxu0
  %v878 = vadd.f32 %v805, %v877
  %v879 = vpop.f32.mrb[0].mxu0
  %880 = vdwg.mxu0
  %v882 = vrot.slane %v878, 2
  %v884 = vmax.f32 %v878, %v882
  %v885 = vrot.slane %v878, 4
  %v887 = vmax.f32 %v884, %v885
  %v888 = vrot.slane %v878, 6
  %v890 = vmax.f32 %v887, %v888
  %v892 = vrot.slane %v890, 6
  %v894 = vrot.slane %v890, 4
  %v896 = vrot.slane %v890, 2
  %v898 = vsel %vm792, %v890, %v892
  %v899 = vsel %vm794, %v898, %v894
  %v900 = vsel %vm796, %v899, %v896
  %v901 = vsub.f32 %v878, %v900
  %v902 = vmul.f32 %v901, 1.442695
  %v903 = vpow.pop %v902
  %v905 = vrot.slane %v903, 2
  %v907 = vadd.f32 %v903, %v905
  %v908 = vrot.slane %v903, 4
  %v910 = vadd.f32 %v907, %v908
  %v911 = vrot.slane %v903, 6
  %v913 = vadd.f32 %v910, %v911
  %v915 = vrot.slane %v913, 6
  %v917 = vrot.slane %v913, 4
  %v919 = vrot.slane %v913, 2
  %v921 = vsel %vm792, %v913, %v915
  %v922 = vsel %vm794, %v921, %v917
  %v923 = vsel %vm796, %v922, %v919
  %v924 = vrcp.pop %v923
  %v925 = vmul.f32 %v903, %v924
  %927 = vrot.lane.b32.xlu0 %v797, 32
  %v928 = vpop.permute.xlu0 %927
  %v930 = vsel %vm357, %v808, %v797
  %vm931 = vcmask 523264
  %v932 = vsel %vm931, %v930, %v928
  %v933 = vld [vmem:[%s7] sm:$0x7]
  %vm934 = vcmask 23552
  %v936 = vsel %vm934, %v925, 0
  %vm938 = vcmask 1042432
  %v940 = vsel %vm938, %v933, 0
  %942 = vmatprep.subr.mxu0 0.0
  %943 = vmatpush1.msra.mxu0 %v940
  %944 = vmatprep.subr.mxu0 0.0
  %945 = vmatpush1.msra.mxu0 0.0
  %946 = vmatprep.subr.mxu0 0.0
  %947 = vmatpush1.msra.mxu0 0.0
  %948 = vmatprep.subr.mxu0 0.0
  %949 = vmatpush1.msra.mxu0 0.0
  %950 = vmatprep.subr.mxu0 0.0
  %951 = vmatpush1.msra.mxu0 0.0
  %952 = vmatprep.subr.mxu0 0.0
  %953 = vmatpush1.msra.mxu0 0.0
  %954 = vmatprep.subr.mxu0 0.0
  %955 = vmatpush1.msra.mxu0 0.0
  %956 = vmatprep.subr.mxu0 0.0
  %957 = vmatpush1.msra.mxu0 0.0
  %958 = vmatprep.subr.mxu0 0.0
  %959 = vmatpush1.msra.mxu0 0.0
  %960 = vmatprep.subr.mxu0 0.0
  %961 = vmatpush1.msra.mxu0 0.0
  %962 = vmatprep.subr.mxu0 0.0
  %963 = vmatpush1.msra.mxu0 0.0
  %964 = vmatprep.subr.mxu0 0.0
  %965 = vmatpush1.msra.mxu0 0.0
  %966 = vmatprep.subr.mxu0 0.0
  %967 = vmatpush1.msra.mxu0 0.0
  %968 = vmatprep.subr.mxu0 0.0
  %969 = vmatpush1.msra.mxu0 0.0
  %970 = vmatprep.subr.mxu0 0.0
  %971 = vmatpush1.msra.mxu0 0.0
  %972 = vmatprep.subr.mxu0 0.0
  %973 = vmatpush1.msra.mxu0 0.0
  %974 = vmatprep.subr.mxu0 0.0
  %975 = vmatpush1.msra.mxu0 0.0
  %976 = vmatprep.subr.mxu0 0.0
  %977 = vmatpush1.msra.mxu0 0.0
  %978 = vmatprep.subr.mxu0 0.0
  %979 = vmatpush1.msra.mxu0 0.0
  %980 = vmatprep.subr.mxu0 0.0
  %981 = vmatpush1.msra.mxu0 0.0
  %982 = vmatprep.subr.mxu0 0.0
  %983 = vmatpush1.msra.mxu0 0.0
  %984 = vmatprep.subr.mxu0 0.0
  %985 = vmatpush1.msra.mxu0 0.0
  %986 = vmatprep.subr.mxu0 0.0
  %987 = vmatpush1.msra.mxu0 0.0
  %988 = vmatprep.subr.mxu0 0.0
  %989 = vmatpush1.msra.mxu0 0.0
  %990 = vmatprep.subr.mxu0 0.0
  %991 = vmatpush1.msra.mxu0 0.0
  %992 = vmatprep.subr.mxu0 0.0
  %993 = vmatpush1.msra.mxu0 0.0
  %994 = vmatprep.subr.mxu0 0.0
  %995 = vmatpush1.msra.mxu0 0.0
  %996 = vmatprep.subr.mxu0 0.0
  %997 = vmatpush1.msra.mxu0 0.0
  %998 = vmatprep.subr.mxu0 0.0
  %999 = vmatpush1.msra.mxu0 0.0
  %1000 = vmatprep.subr.mxu0 0.0
  %1001 = vmatpush1.msra.mxu0 0.0
  %1002 = vmatprep.subr.mxu0 0.0
  %1003 = vmatpush1.msra.mxu0 0.0
  %1004 = vmatprep.subr.mxu0 0.0
  %1005 = vmatpush1.msra.mxu0 0.0
  %1006 = vmatprep.mubr.f32.mxu0 0.0
  %1007 = vmatmul.mubr.f32.gmra.mrb[0].mxu0 %v936
  %v1008 = vpop.f32.mrb[0].mxu0
  %v1009 = vadd.f32 0.0, %v1008
  %v1010 = vpop.f32.mrb[0].mxu0
  %1011 = vdwg.mxu0
  %v1012 = vld [vmem:[%s8] sm:$0x3]
  %v1013 = vmul.f32 %v1009, %v932
  %v1015 = vsel %vm124, %v1012, 0
  %1017 = vmatprep.subr.mxu0 0.0
  %1018 = vmatpush1.msra.mxu0 %v1013
  %1019 = vmatprep.subr.mxu0 0.0
  %1020 = vmatpush1.msra.mxu0 0.0
  %1021 = vmatprep.subr.mxu0 0.0
  %1022 = vmatpush1.msra.mxu0 0.0
  %1023 = vmatprep.subr.mxu0 0.0
  %1024 = vmatpush1.msra.mxu0 0.0
  %1025 = vmatprep.subr.mxu0 0.0
  %1026 = vmatpush1.msra.mxu0 0.0
  %1027 = vmatprep.subr.mxu0 0.0
  %1028 = vmatpush1.msra.mxu0 0.0
  %1029 = vmatprep.subr.mxu0 0.0
  %1030 = vmatpush1.msra.mxu0 0.0
  %1031 = vmatprep.subr.mxu0 0.0
  %1032 = vmatpush1.msra.mxu0 0.0
  %1033 = vmatprep.subr.mxu0 0.0
  %1034 = vmatpush1.msra.mxu0 0.0
  %1035 = vmatprep.subr.mxu0 0.0
  %1036 = vmatpush1.msra.mxu0 0.0
  %1037 = vmatprep.subr.mxu0 0.0
  %1038 = vmatpush1.msra.mxu0 0.0
  %1039 = vmatprep.subr.mxu0 0.0
  %1040 = vmatpush1.msra.mxu0 0.0
  %1041 = vmatprep.subr.mxu0 0.0
  %1042 = vmatpush1.msra.mxu0 0.0
  %1043 = vmatprep.subr.mxu0 0.0
  %1044 = vmatpush1.msra.mxu0 0.0
  %1045 = vmatprep.subr.mxu0 0.0
  %1046 = vmatpush1.msra.mxu0 0.0
  %1047 = vmatprep.subr.mxu0 0.0
  %1048 = vmatpush1.msra.mxu0 0.0
  %1049 = vmatprep.subr.mxu0 0.0
  %1050 = vmatpush1.msra.mxu0 0.0
  %1051 = vmatprep.subr.mxu0 0.0
  %1052 = vmatpush1.msra.mxu0 0.0
  %1053 = vmatprep.subr.mxu0 0.0
  %1054 = vmatpush1.msra.mxu0 0.0
  %1055 = vmatprep.subr.mxu0 0.0
  %1056 = vmatpush1.msra.mxu0 0.0
  %1057 = vmatprep.subr.mxu0 0.0
  %1058 = vmatpush1.msra.mxu0 0.0
  %1059 = vmatprep.subr.mxu0 0.0
  %1060 = vmatpush1.msra.mxu0 0.0
  %1061 = vmatprep.subr.mxu0 0.0
  %1062 = vmatpush1.msra.mxu0 0.0
  %1063 = vmatprep.subr.mxu0 0.0
  %1064 = vmatpush1.msra.mxu0 0.0
  %1065 = vmatprep.subr.mxu0 0.0
  %1066 = vmatpush1.msra.mxu0 0.0
  %1067 = vmatprep.subr.mxu0 0.0
  %1068 = vmatpush1.msra.mxu0 0.0
  %1069 = vmatprep.subr.mxu0 0.0
  %1070 = vmatpush1.msra.mxu0 0.0
  %1071 = vmatprep.subr.mxu0 0.0
  %1072 = vmatpush1.msra.mxu0 0.0
  %1073 = vmatprep.subr.mxu0 0.0
  %1074 = vmatpush1.msra.mxu0 0.0
  %1075 = vmatprep.subr.mxu0 0.0
  %1076 = vmatpush1.msra.mxu0 0.0
  %1077 = vmatprep.subr.mxu0 0.0
  %1078 = vmatpush1.msra.mxu0 0.0
  %1079 = vmatprep.subr.mxu0 0.0
  %1080 = vmatpush1.msra.mxu0 0.0
  %1081 = vmatprep.mubr.f32.mxu0 0.0
  %1082 = vmatmul.mubr.f32.gmra.mrb[0].mxu0 %v1015
  %v1083 = vpop.f32.mrb[0].mxu0
  %v1084 = vadd.f32 0.0, %v1083
  %v1085 = vpop.f32.mrb[0].mxu0
  %1086 = vdwg.mxu0
  %v1087 = vld [vmem:[%s9] sm:$0xff]
  %v1088 = vld [vmem:[%s9 + $0x8] sm:$0xff]
  %v1089 = vld [vmem:[%s9 + $0x10] sm:$0xff]
  %v1090 = vld [vmem:[%s9 + $0x18] sm:$0xff]
  %v1091 = vld [vmem:[%s9 + $0x20] sm:$0xff]
  %v1092 = vld [vmem:[%s9 + $0x28] sm:$0xff]
  %v1093 = vld [vmem:[%s9 + $0x30] sm:$0xff]
  %v1094 = vld [vmem:[%s9 + $0x38] sm:$0xff]
  %v1095 = vld [vmem:[%s9 + $0x40] sm:$0xff]
  %v1096 = vld [vmem:[%s9 + $0x48] sm:$0xff]
  %v1097 = vld [vmem:[%s9 + $0x50] sm:$0xff]
  %v1098 = vld [vmem:[%s9 + $0x58] sm:$0xff]
  %v1099 = vlaneseq
  %v1100 = vshrl.u32 %v1099, 7
  %v1101 = vsub.s32 3, %v1100
  %v1102 = vrot.slane %v39, %v1101
  %vm1103 = vcmask 785408
  %v1105 = vsel %vm1103, %v1084, 0
  %1107 = vmatprep.subr.mxu0 0.0
  %1108 = vmatpush1.msra.mxu0 %v1087
  %1109 = vmatprep.subr.mxu0 0.0
  %1110 = vmatpush1.msra.mxu0 %v1088
  %1111 = vmatprep.subr.mxu0 0.0
  %1112 = vmatpush1.msra.mxu0 %v1089
  %1113 = vmatprep.subr.mxu0 0.0
  %1114 = vmatpush1.msra.mxu0 %v1090
  %1115 = vmatprep.subr.mxu0 0.0
  %1116 = vmatpush1.msra.mxu0 %v1091
  %1117 = vmatprep.subr.mxu0 0.0
  %1118 = vmatpush1.msra.mxu0 %v1092
  %1119 = vmatprep.subr.mxu0 0.0
  %1120 = vmatpush1.msra.mxu0 %v1093
  %1121 = vmatprep.subr.mxu0 0.0
  %1122 = vmatpush1.msra.mxu0 %v1094
  %1123 = vmatprep.subr.mxu0 0.0
  %1124 = vmatpush1.msra.mxu0 %v1095
  %1125 = vmatprep.subr.mxu0 0.0
  %1126 = vmatpush1.msra.mxu0 %v1096
  %1127 = vmatprep.subr.mxu0 0.0
  %1128 = vmatpush1.msra.mxu0 %v1097
  %1129 = vmatprep.subr.mxu0 0.0
  %1130 = vmatpush1.msra.mxu0 %v1098
  %1131 = vmatprep.subr.mxu0 0.0
  %1132 = vmatpush1.msra.mxu0 0.0
  %1133 = vmatprep.subr.mxu0 0.0
  %1134 = vmatpush1.msra.mxu0 0.0
  %1135 = vmatprep.subr.mxu0 0.0
  %1136 = vmatpush1.msra.mxu0 0.0
  %1137 = vmatprep.subr.mxu0 0.0
  %1138 = vmatpush1.msra.mxu0 0.0
  %1139 = vmatprep.subr.mxu0 0.0
  %1140 = vmatpush1.msra.mxu0 0.0
  %1141 = vmatprep.subr.mxu0 0.0
  %1142 = vmatpush1.msra.mxu0 0.0
  %1143 = vmatprep.subr.mxu0 0.0
  %1144 = vmatpush1.msra.mxu0 0.0
  %1145 = vmatprep.subr.mxu0 0.0
  %1146 = vmatpush1.msra.mxu0 0.0
  %1147 = vmatprep.subr.mxu0 0.0
  %1148 = vmatpush1.msra.mxu0 0.0
  %1149 = vmatprep.subr.mxu0 0.0
  %1150 = vmatpush1.msra.mxu0 0.0
  %1151 = vmatprep.subr.mxu0 0.0
  %1152 = vmatpush1.msra.mxu0 0.0
  %1153 = vmatprep.subr.mxu0 0.0
  %1154 = vmatpush1.msra.mxu0 0.0
  %1155 = vmatprep.subr.mxu0 0.0
  %1156 = vmatpush1.msra.mxu0 0.0
  %1157 = vmatprep.subr.mxu0 0.0
  %1158 = vmatpush1.msra.mxu0 0.0
  %1159 = vmatprep.subr.mxu0 0.0
  %1160 = vmatpush1.msra.mxu0 0.0
  %1161 = vmatprep.subr.mxu0 0.0
  %1162 = vmatpush1.msra.mxu0 0.0
  %1163 = vmatprep.subr.mxu0 0.0
  %1164 = vmatpush1.msra.mxu0 0.0
  %1165 = vmatprep.subr.mxu0 0.0
  %1166 = vmatpush1.msra.mxu0 0.0
  %1167 = vmatprep.subr.mxu0 0.0
  %1168 = vmatpush1.msra.mxu0 0.0
  %1169 = vmatprep.subr.mxu0 0.0
  %1170 = vmatpush1.msra.mxu0 0.0
  %1171 = vmatprep.mubr.f32.mxu0 0.0
  %1172 = vmatmul.mubr.f32.gmra.mrb[0].mxu0 %v1105
  %v1173 = vpop.f32.mrb[0].mxu0
  %v1174 = vadd.f32 %v1102, %v1173
  %v1175 = vpop.f32.mrb[0].mxu0
  %1176 = vdwg.mxu0
  %vm1177 = vcmask 25600
  %v1178 = vsel %vm1177, %v1174, -inf
  %1179 = vmax.xlane.f32.xlu0 %v1178
  %v1180 = vpop.xlane.xlu0 %1179
  %v1181 = vsub.f32 %v1174, %v1180
  %v1182 = vmul.f32 %v1181, 1.442695
  %v1183 = vpow.pop %v1182
  %v1184 = vsel %vm1177, %v1183, 0.0
  %1185 = vadd.xlane.f32.xlu0 %v1184
  %v1186 = vpop.xlane.xlu0 %1185
  %v1187 = vrcp.pop %v1186
  %v1188 = vmul.f32 %v1183, %v1187
  %1189 = vst [vmem:[%s11] sm:$0xff] 0.0
  %1190 = vst [vmem:[%s11 + $0x8] sm:$0xff] 0.0
  %1191 = vst [vmem:[%s11 + $0x10] sm:$0xff] 0.0
  %1192 = vst.msk [vmem:[%s11] sm:$0xff] %vm124, %v122
  %1193 = vst.msk [vmem:[%s11 + $0x8] sm:$0xff] %vm934, %v925
  %1194 = vst.msk [vmem:[%s11 + $0x10] sm:$0x3] %vm1177, %v1188
  // Predicated region
  $region46: #{patient2vec_forward.1} parent=0 // pred_check
    _
  $region47: #{patient2vec_forward.1} parent=0 // pred_check_branch
    %1196 = sbr.rel (0) target = $region49
  $region48: #{patient2vec_forward.1} parent=0 // pred_region
    _
  $region49: #{patient2vec_forward.1} parent=0 // pred_fallthru
    _
  // Predicated region
  $region50: #{patient2vec_forward.1} parent=0 // pred_check
    _
  $region51: #{patient2vec_forward.1} parent=0 // pred_check_branch
    %1198 = sbr.rel (0) target = $region53
  $region52: #{patient2vec_forward.1} parent=0 // pred_region
    _
  $region53: #{patient2vec_forward.1} parent=0 // pred_fallthru
    _

</llo_original>
